<compile_context>
chip_gen: v7x
topology: tpu7x:2x2x1
jax: 0.10.0
libtpu: 0.0.40
codegen_flags: <defaults>
</compile_context>

<pallas_src>
import functools
import math

import jax
import jax.numpy as jnp
from jax.experimental import pallas as pl
from jax.experimental.pallas import tpu as pltpu


def mha_kernel(q_ref, k_ref, v_ref, wq_ref, wk_ref, wv_ref, wo_ref, o_ref, *,
               num_frames, scale):
    # q/k/v/o blocks: (Rb, hidden), Rb = Gb groups * num_frames rows.
    # weight blocks: wq/wk/wv (H, hidden, D), wo (H, D, hidden), all bf16.
    R, C = q_ref.shape
    H = wq_ref.shape[0]
    D = wq_ref.shape[2]
    F = num_frames
    Gb = R // F

    xq = q_ref[...]                                   # (R, C) bf16
    xk = k_ref[...]
    xv = v_ref[...]

    acc = jnp.zeros((R, C), jnp.float32)              # output-projection acc

    # head_size is small (4): a static unrolled loop keeps exactly one head's
    # intermediates live at a time and re-uses the same activation vregs for
    # every head (no broadcast copies). FLOPs identical to a batched einsum.
    for h in range(H):
        # QKV projections for this head: (R, C) @ (C, D) on the MXU, f32 acc.
        qh = jnp.dot(xq, wq_ref[h], preferred_element_type=jnp.float32)
        kh = jnp.dot(xk, wk_ref[h], preferred_element_type=jnp.float32)
        vh = jnp.dot(xv, wv_ref[h], preferred_element_type=jnp.float32)

        # Attention is block-diagonal over groups of F frames: leading-dim
        # reshape only (F is a multiple of 8, sublane tiling stays aligned).
        qg = qh.astype(jnp.bfloat16).reshape(Gb, F, D)
        kg = kh.astype(jnp.bfloat16).reshape(Gb, F, D)
        vg = vh.astype(jnp.bfloat16).reshape(Gb, F, D)

        s = jnp.einsum('gfd,gkd->gfk', qg, kg,
                       preferred_element_type=jnp.float32) * scale  # (Gb,F,F)
        # Softmax kept in f32 on the VPU/EUP (v5e has no bf16 VPU/EUP).
        s = s - jnp.max(s, axis=-1, keepdims=True)
        p = jnp.exp(s)
        p = p * pl.reciprocal(jnp.sum(p, axis=-1, keepdims=True), approx=True)
        # TODO(synk): attention dropout is identity here (eval mode / rate=0).

        ctx = jnp.einsum('gfk,gkd->gfd', p.astype(jnp.bfloat16), vg,
                         preferred_element_type=jnp.float32)        # (Gb,F,D)

        # Per-head slice of the output projection, summed into the f32 acc —
        # no concat over heads, no lane-offset slices.
        ctx2 = ctx.reshape(R, D).astype(jnp.bfloat16)
        acc = acc + jnp.dot(ctx2, wo_ref[h],
                            preferred_element_type=jnp.float32)     # (R, C)

    o_ref[...] = acc.astype(o_ref.dtype)


def _choose_group_block(num_groups, num_frames, hidden, *, target_rows=256,
                        max_block_bytes=2 << 20):
    """Pick Gb (groups per grid step): big enough rows for the MXU, small
    enough for VMEM double-buffering, and keep >=2 grid steps for megacore."""
    row_bytes = max(1, hidden * 2)                    # bf16 activations
    cap = max(1, target_rows // max(num_frames, 1))
    cap = min(cap, max(1, max_block_bytes // max(1, num_frames * row_bytes)))
    cap = min(cap, num_groups)
    gb = max(d for d in range(1, num_groups + 1)
             if num_groups % d == 0 and d <= cap)
    # Keep at least two grid steps when possible so v7x's 2 TCs can split it.
    if num_groups // gb < 2 and num_groups >= 2:
        half = num_groups // 2
        gb = max(d for d in range(1, half + 1) if num_groups % d == 0)
    return gb


def multi_head_attention(q, k, v, wq, wk, wv, wo, *, head_size, att_size,
                         num_frames):
    B, L, hidden = q.shape
    assert L % num_frames == 0, "sequence length must be divisible by num_frames"
    G = L // num_frames
    BG = B * G
    F = num_frames
    H, D = head_size, att_size
    scale = att_size ** (-0.5)
    out_dtype = q.dtype

    bf = jnp.bfloat16
    # Head-major bf16 weights so every in-kernel contraction is a clean
    # per-head MXU matmul (no lane-offset slicing of the fused H*D axis).
    wq_h = wq.reshape(hidden, H, D).transpose(1, 0, 2).astype(bf)   # (H, C, D)
    wk_h = wk.reshape(hidden, H, D).transpose(1, 0, 2).astype(bf)
    wv_h = wv.reshape(hidden, H, D).transpose(1, 0, 2).astype(bf)
    wo_h = wo.reshape(H, D, hidden).astype(bf)                      # (H, D, C)

    # Lane-dense 2-D activation slabs: rows = (batch, group, frame).
    qr = q.reshape(BG * F, hidden).astype(bf)
    kr = k.reshape(BG * F, hidden).astype(bf)
    vr = v.reshape(BG * F, hidden).astype(bf)

    Gb = _choose_group_block(BG, F, hidden)
    Rb = Gb * F
    assert Rb % 8 == 0 or Rb == BG * F, "row block must align to sublanes"
    grid = (BG // Gb,)

    kernel = functools.partial(mha_kernel, num_frames=F, scale=scale)

    out = pl.pallas_call(
        kernel,
        out_shape=jax.ShapeDtypeStruct((BG * F, hidden), out_dtype),
        grid_spec=pltpu.PrefetchScalarGridSpec(
            num_scalar_prefetch=0,
            grid=grid,
            in_specs=[
                pl.BlockSpec((Rb, hidden), lambda i: (i, 0)),
                pl.BlockSpec((Rb, hidden), lambda i: (i, 0)),
                pl.BlockSpec((Rb, hidden), lambda i: (i, 0)),
                pl.BlockSpec((H, hidden, D), lambda i: (0, 0, 0)),
                pl.BlockSpec((H, hidden, D), lambda i: (0, 0, 0)),
                pl.BlockSpec((H, hidden, D), lambda i: (0, 0, 0)),
                pl.BlockSpec((H, D, hidden), lambda i: (0, 0, 0)),
            ],
            out_specs=pl.BlockSpec((Rb, hidden), lambda i: (i, 0)),
        ),
        compiler_params=pltpu.CompilerParams(
            dimension_semantics=("parallel",)),
    )(qr, kr, vr, wq_h, wk_h, wv_h, wo_h)

    return out.reshape(B, L, hidden)


def reference_mha(q, k, v, wq, wk, wv, wo, head_size, att_size, num_frames):
    """Pure-JAX reference mirroring the PyTorch forward, with the same
    precision contract as the kernel (bf16 MXU operands, f32 accumulation)."""
    B, L, hidden = q.shape
    G = L // num_frames
    H, D = head_size, att_size
    bf = jnp.bfloat16
    scale = att_size ** (-0.5)
    dot = functools.partial(jnp.einsum, preferred_element_type=jnp.float32)
    Q = dot('blc,cn->bln', q.astype(bf), wq.astype(bf)).reshape(B, G, num_frames, H, D)
    K = dot('blc,cn->bln', k.astype(bf), wk.astype(bf)).reshape(B, G, num_frames, H, D)
    V = dot('blc,cn->bln', v.astype(bf), wv.astype(bf)).reshape(B, G, num_frames, H, D)
    Q = jnp.swapaxes(Q, -2, -3)            # (B, G, H, F, D)
    K = jnp.swapaxes(K, -2, -3)
    V = jnp.swapaxes(V, -2, -3)
    s = dot('bghfd,bghkd->bghfk', Q.astype(bf), K.astype(bf)) * scale
    p = jax.nn.softmax(s, axis=-1)
    x = dot('bghfk,bghkd->bghfd', p.astype(bf), V.astype(bf))
    x = jnp.swapaxes(x, 2, 3).reshape(B, L, H * D)
    return dot('bln,nc->blc', x.astype(bf), wo.astype(bf))


def xavier_uniform(key, fan_in, fan_out):
    bound = math.sqrt(6.0 / (fan_in + fan_out))
    return jax.random.uniform(key, (fan_in, fan_out), jnp.float32, -bound, bound)


if __name__ == "__main__":
    key = jax.random.PRNGKey(0)
    B = 2
    hidden = 32
    head_size = 4
    att_size = hidden           # module default: att_size = hidden_size
    num_frames = 8
    G = 2
    L = G * num_frames          # sequence length = groups * num_frames

    k1, k2, k3, k4, k5, k6, k7 = jax.random.split(key, 7)
    wq = xavier_uniform(k1, hidden, head_size * att_size)
    wk = xavier_uniform(k2, hidden, head_size * att_size)
    wv = xavier_uniform(k3, hidden, head_size * att_size)
    wo = xavier_uniform(k4, head_size * att_size, hidden)

    q = jax.random.normal(k5, (B, L, hidden), jnp.float32)
    kk = jax.random.normal(k6, (B, L, hidden), jnp.float32)
    v = jax.random.normal(k7, (B, L, hidden), jnp.float32)

    out = multi_head_attention(q, kk, v, wq, wk, wv, wo,
                               head_size=head_size, att_size=att_size,
                               num_frames=num_frames)
    out = jax.block_until_ready(out)

    ref = reference_mha(q, kk, v, wq, wk, wv, wo,
                        head_size, att_size, num_frames)
    assert out.shape == q.shape
    max_err = jnp.max(jnp.abs(out - ref))
    assert jnp.allclose(out, ref, atol=2e-2, rtol=2e-2), f"mismatch vs reference: {max_err}"
    print("KERNEL_OK")
</pallas_src>

<mosaic_0001>
module attributes {stable_mosaic.version = 11 : i64} {
  func.func @mha_kernel(%arg0: i32, %arg1: memref<16x32xbf16, #tpu.memory_space<vmem>>, %arg2: memref<16x32xbf16, #tpu.memory_space<vmem>>, %arg3: memref<16x32xbf16, #tpu.memory_space<vmem>>, %arg4: memref<4x32x32xbf16, #tpu.memory_space<vmem>>, %arg5: memref<4x32x32xbf16, #tpu.memory_space<vmem>>, %arg6: memref<4x32x32xbf16, #tpu.memory_space<vmem>>, %arg7: memref<4x32x32xbf16, #tpu.memory_space<vmem>>, %arg8: memref<16x32xf32, #tpu.memory_space<vmem>>) attributes {dimension_semantics = [#tpu.dimension_semantics<parallel>], iteration_bounds = array<i64: 2>, scalar_prefetch = 0 : i64, scratch_operands = 0 : i64, tpu.core_type = #tpu.core_type<tc>, window_params = [{transform_indices = @transform_0, window_bounds = array<i64: 16, 32>}, {transform_indices = @transform_1, window_bounds = array<i64: 16, 32>}, {transform_indices = @transform_2, window_bounds = array<i64: 16, 32>}, {pipeline_mode = #tpu.pipeline_mode<synchronous>, transform_indices = @transform_3, window_bounds = array<i64: 4, 32, 32>}, {pipeline_mode = #tpu.pipeline_mode<synchronous>, transform_indices = @transform_4, window_bounds = array<i64: 4, 32, 32>}, {pipeline_mode = #tpu.pipeline_mode<synchronous>, transform_indices = @transform_5, window_bounds = array<i64: 4, 32, 32>}, {pipeline_mode = #tpu.pipeline_mode<synchronous>, transform_indices = @transform_6, window_bounds = array<i64: 4, 32, 32>}, {transform_indices = @transform_7, window_bounds = array<i64: 16, 32>}]} {
    %c0 = arith.constant 0 : index
    %c0_0 = arith.constant 0 : index
    %0 = vector.load %arg1[%c0, %c0_0] : memref<16x32xbf16, #tpu.memory_space<vmem>>, vector<16x32xbf16>
    %c0_1 = arith.constant 0 : index
    %c0_2 = arith.constant 0 : index
    %1 = vector.load %arg2[%c0_1, %c0_2] : memref<16x32xbf16, #tpu.memory_space<vmem>>, vector<16x32xbf16>
    %c0_3 = arith.constant 0 : index
    %c0_4 = arith.constant 0 : index
    %2 = vector.load %arg3[%c0_3, %c0_4] : memref<16x32xbf16, #tpu.memory_space<vmem>>, vector<16x32xbf16>
    %cst = arith.constant 0.000000e+00 : f32
    %3 = vector.broadcast %cst : f32 to vector<16x32xf32>
    %c0_5 = arith.constant 0 : index
    %c0_6 = arith.constant 0 : index
    %c0_7 = arith.constant 0 : index
    %4 = vector.load %arg4[%c0_5, %c0_6, %c0_7] : memref<4x32x32xbf16, #tpu.memory_space<vmem>>, vector<1x32x32xbf16>
    %5 = vector.shape_cast %4 : vector<1x32x32xbf16> to vector<32x32xbf16>
    %cst_8 = arith.constant dense<0.000000e+00> : vector<16x32xf32>
    %6 = tpu.matmul %0, %5, %cst_8 {dimension_numbers = #tpu.dot_dimension_numbers<[1], [0], [0], [1], [0, 0, 1, 1], [], []>} : vector<16x32xbf16>, vector<32x32xbf16>, vector<16x32xf32> -> vector<16x32xf32>
    %c0_9 = arith.constant 0 : index
    %c0_10 = arith.constant 0 : index
    %c0_11 = arith.constant 0 : index
    %7 = vector.load %arg5[%c0_9, %c0_10, %c0_11] : memref<4x32x32xbf16, #tpu.memory_space<vmem>>, vector<1x32x32xbf16>
    %8 = vector.shape_cast %7 : vector<1x32x32xbf16> to vector<32x32xbf16>
    %cst_12 = arith.constant dense<0.000000e+00> : vector<16x32xf32>
    %9 = tpu.matmul %1, %8, %cst_12 {dimension_numbers = #tpu.dot_dimension_numbers<[1], [0], [0], [1], [0, 0, 1, 1], [], []>} : vector<16x32xbf16>, vector<32x32xbf16>, vector<16x32xf32> -> vector<16x32xf32>
    %c0_13 = arith.constant 0 : index
    %c0_14 = arith.constant 0 : index
    %c0_15 = arith.constant 0 : index
    %10 = vector.load %arg6[%c0_13, %c0_14, %c0_15] : memref<4x32x32xbf16, #tpu.memory_space<vmem>>, vector<1x32x32xbf16>
    %11 = vector.shape_cast %10 : vector<1x32x32xbf16> to vector<32x32xbf16>
    %cst_16 = arith.constant dense<0.000000e+00> : vector<16x32xf32>
    %12 = tpu.matmul %2, %11, %cst_16 {dimension_numbers = #tpu.dot_dimension_numbers<[1], [0], [0], [1], [0, 0, 1, 1], [], []>} : vector<16x32xbf16>, vector<32x32xbf16>, vector<16x32xf32> -> vector<16x32xf32>
    %13 = arith.truncf %6 : vector<16x32xf32> to vector<16x32xbf16>
    %14 = vector.shape_cast %13 : vector<16x32xbf16> to vector<2x8x32xbf16>
    %15 = arith.truncf %9 : vector<16x32xf32> to vector<16x32xbf16>
    %16 = vector.shape_cast %15 : vector<16x32xbf16> to vector<2x8x32xbf16>
    %17 = arith.truncf %12 : vector<16x32xf32> to vector<16x32xbf16>
    %18 = vector.shape_cast %17 : vector<16x32xbf16> to vector<2x8x32xbf16>
    "tpu.trace_start"() <{level = 10 : i32, message = "gfd,gkd->gfk"}> : () -> ()
    %cst_17 = arith.constant dense<0.000000e+00> : vector<2x8x8xf32>
    %19 = tpu.matmul %14, %16, %cst_17 {dimension_numbers = #tpu.dot_dimension_numbers<[2], [2], [1], [1], [0, 0, 0, 1, 1, 1], [0], [0]>} : vector<2x8x32xbf16>, vector<2x8x32xbf16>, vector<2x8x8xf32> -> vector<2x8x8xf32>
    "tpu.trace_stop"() : () -> ()
    %cst_18 = arith.constant 0.176776692 : f32
    %20 = vector.broadcast %cst_18 : f32 to vector<2x8x8xf32>
    %21 = arith.mulf %19, %20 : vector<2x8x8xf32>
    %cst_19 = arith.constant dense<0xFF800000> : vector<2x8xf32>
    %22 = vector.multi_reduction <maximumf>, %21, %cst_19 [2] : vector<2x8x8xf32> to vector<2x8xf32>
    %23 = vector.shape_cast %22 : vector<2x8xf32> to vector<2x8x1xf32>
    %24 = vector.broadcast %23 : vector<2x8x1xf32> to vector<2x8x8xf32>
    %25 = arith.subf %21, %24 : vector<2x8x8xf32>
    %26 = math.exp %25 : vector<2x8x8xf32>
    %cst_20 = arith.constant dense<0.000000e+00> : vector<2x8xf32>
    %27 = vector.multi_reduction <add>, %26, %cst_20 [2] : vector<2x8x8xf32> to vector<2x8xf32>
    %28 = vector.shape_cast %27 : vector<2x8xf32> to vector<2x8x1xf32>
    %29 = tpu.reciprocal %28 {approx = true} : vector<2x8x1xf32> -> vector<2x8x1xf32>
    %30 = vector.broadcast %29 : vector<2x8x1xf32> to vector<2x8x8xf32>
    %31 = arith.mulf %26, %30 : vector<2x8x8xf32>
    %32 = arith.truncf %31 : vector<2x8x8xf32> to vector<2x8x8xbf16>
    "tpu.trace_start"() <{level = 10 : i32, message = "gfk,gkd->gfd"}> : () -> ()
    %cst_21 = arith.constant dense<0.000000e+00> : vector<2x8x32xf32>
    %33 = tpu.matmul %32, %18, %cst_21 {dimension_numbers = #tpu.dot_dimension_numbers<[2], [1], [1], [2], [0, 0, 0, 1, 1, 2], [0], [0]>} : vector<2x8x8xbf16>, vector<2x8x32xbf16>, vector<2x8x32xf32> -> vector<2x8x32xf32>
    "tpu.trace_stop"() : () -> ()
    %34 = vector.shape_cast %33 : vector<2x8x32xf32> to vector<16x32xf32>
    %35 = arith.truncf %34 : vector<16x32xf32> to vector<16x32xbf16>
    %c0_22 = arith.constant 0 : index
    %c0_23 = arith.constant 0 : index
    %c0_24 = arith.constant 0 : index
    %36 = vector.load %arg7[%c0_22, %c0_23, %c0_24] : memref<4x32x32xbf16, #tpu.memory_space<vmem>>, vector<1x32x32xbf16>
    %37 = vector.shape_cast %36 : vector<1x32x32xbf16> to vector<32x32xbf16>
    %cst_25 = arith.constant dense<0.000000e+00> : vector<16x32xf32>
    %38 = tpu.matmul %35, %37, %cst_25 {dimension_numbers = #tpu.dot_dimension_numbers<[1], [0], [0], [1], [0, 0, 1, 1], [], []>} : vector<16x32xbf16>, vector<32x32xbf16>, vector<16x32xf32> -> vector<16x32xf32>
    %39 = arith.addf %3, %38 : vector<16x32xf32>
    %c1 = arith.constant 1 : index
    %c0_26 = arith.constant 0 : index
    %c0_27 = arith.constant 0 : index
    %40 = vector.load %arg4[%c1, %c0_26, %c0_27] : memref<4x32x32xbf16, #tpu.memory_space<vmem>>, vector<1x32x32xbf16>
    %41 = vector.shape_cast %40 : vector<1x32x32xbf16> to vector<32x32xbf16>
    %cst_28 = arith.constant dense<0.000000e+00> : vector<16x32xf32>
    %42 = tpu.matmul %0, %41, %cst_28 {dimension_numbers = #tpu.dot_dimension_numbers<[1], [0], [0], [1], [0, 0, 1, 1], [], []>} : vector<16x32xbf16>, vector<32x32xbf16>, vector<16x32xf32> -> vector<16x32xf32>
    %c1_29 = arith.constant 1 : index
    %c0_30 = arith.constant 0 : index
    %c0_31 = arith.constant 0 : index
    %43 = vector.load %arg5[%c1_29, %c0_30, %c0_31] : memref<4x32x32xbf16, #tpu.memory_space<vmem>>, vector<1x32x32xbf16>
    %44 = vector.shape_cast %43 : vector<1x32x32xbf16> to vector<32x32xbf16>
    %cst_32 = arith.constant dense<0.000000e+00> : vector<16x32xf32>
    %45 = tpu.matmul %1, %44, %cst_32 {dimension_numbers = #tpu.dot_dimension_numbers<[1], [0], [0], [1], [0, 0, 1, 1], [], []>} : vector<16x32xbf16>, vector<32x32xbf16>, vector<16x32xf32> -> vector<16x32xf32>
    %c1_33 = arith.constant 1 : index
    %c0_34 = arith.constant 0 : index
    %c0_35 = arith.constant 0 : index
    %46 = vector.load %arg6[%c1_33, %c0_34, %c0_35] : memref<4x32x32xbf16, #tpu.memory_space<vmem>>, vector<1x32x32xbf16>
    %47 = vector.shape_cast %46 : vector<1x32x32xbf16> to vector<32x32xbf16>
    %cst_36 = arith.constant dense<0.000000e+00> : vector<16x32xf32>
    %48 = tpu.matmul %2, %47, %cst_36 {dimension_numbers = #tpu.dot_dimension_numbers<[1], [0], [0], [1], [0, 0, 1, 1], [], []>} : vector<16x32xbf16>, vector<32x32xbf16>, vector<16x32xf32> -> vector<16x32xf32>
    %49 = arith.truncf %42 : vector<16x32xf32> to vector<16x32xbf16>
    %50 = vector.shape_cast %49 : vector<16x32xbf16> to vector<2x8x32xbf16>
    %51 = arith.truncf %45 : vector<16x32xf32> to vector<16x32xbf16>
    %52 = vector.shape_cast %51 : vector<16x32xbf16> to vector<2x8x32xbf16>
    %53 = arith.truncf %48 : vector<16x32xf32> to vector<16x32xbf16>
    %54 = vector.shape_cast %53 : vector<16x32xbf16> to vector<2x8x32xbf16>
    "tpu.trace_start"() <{level = 10 : i32, message = "gfd,gkd->gfk"}> : () -> ()
    %cst_37 = arith.constant dense<0.000000e+00> : vector<2x8x8xf32>
    %55 = tpu.matmul %50, %52, %cst_37 {dimension_numbers = #tpu.dot_dimension_numbers<[2], [2], [1], [1], [0, 0, 0, 1, 1, 1], [0], [0]>} : vector<2x8x32xbf16>, vector<2x8x32xbf16>, vector<2x8x8xf32> -> vector<2x8x8xf32>
    "tpu.trace_stop"() : () -> ()
    %cst_38 = arith.constant 0.176776692 : f32
    %56 = vector.broadcast %cst_38 : f32 to vector<2x8x8xf32>
    %57 = arith.mulf %55, %56 : vector<2x8x8xf32>
    %cst_39 = arith.constant dense<0xFF800000> : vector<2x8xf32>
    %58 = vector.multi_reduction <maximumf>, %57, %cst_39 [2] : vector<2x8x8xf32> to vector<2x8xf32>
    %59 = vector.shape_cast %58 : vector<2x8xf32> to vector<2x8x1xf32>
    %60 = vector.broadcast %59 : vector<2x8x1xf32> to vector<2x8x8xf32>
    %61 = arith.subf %57, %60 : vector<2x8x8xf32>
    %62 = math.exp %61 : vector<2x8x8xf32>
    %cst_40 = arith.constant dense<0.000000e+00> : vector<2x8xf32>
    %63 = vector.multi_reduction <add>, %62, %cst_40 [2] : vector<2x8x8xf32> to vector<2x8xf32>
    %64 = vector.shape_cast %63 : vector<2x8xf32> to vector<2x8x1xf32>
    %65 = tpu.reciprocal %64 {approx = true} : vector<2x8x1xf32> -> vector<2x8x1xf32>
    %66 = vector.broadcast %65 : vector<2x8x1xf32> to vector<2x8x8xf32>
    %67 = arith.mulf %62, %66 : vector<2x8x8xf32>
    %68 = arith.truncf %67 : vector<2x8x8xf32> to vector<2x8x8xbf16>
    "tpu.trace_start"() <{level = 10 : i32, message = "gfk,gkd->gfd"}> : () -> ()
    %cst_41 = arith.constant dense<0.000000e+00> : vector<2x8x32xf32>
    %69 = tpu.matmul %68, %54, %cst_41 {dimension_numbers = #tpu.dot_dimension_numbers<[2], [1], [1], [2], [0, 0, 0, 1, 1, 2], [0], [0]>} : vector<2x8x8xbf16>, vector<2x8x32xbf16>, vector<2x8x32xf32> -> vector<2x8x32xf32>
    "tpu.trace_stop"() : () -> ()
    %70 = vector.shape_cast %69 : vector<2x8x32xf32> to vector<16x32xf32>
    %71 = arith.truncf %70 : vector<16x32xf32> to vector<16x32xbf16>
    %c1_42 = arith.constant 1 : index
    %c0_43 = arith.constant 0 : index
    %c0_44 = arith.constant 0 : index
    %72 = vector.load %arg7[%c1_42, %c0_43, %c0_44] : memref<4x32x32xbf16, #tpu.memory_space<vmem>>, vector<1x32x32xbf16>
    %73 = vector.shape_cast %72 : vector<1x32x32xbf16> to vector<32x32xbf16>
    %cst_45 = arith.constant dense<0.000000e+00> : vector<16x32xf32>
    %74 = tpu.matmul %71, %73, %cst_45 {dimension_numbers = #tpu.dot_dimension_numbers<[1], [0], [0], [1], [0, 0, 1, 1], [], []>} : vector<16x32xbf16>, vector<32x32xbf16>, vector<16x32xf32> -> vector<16x32xf32>
    %75 = arith.addf %39, %74 : vector<16x32xf32>
    %c2 = arith.constant 2 : index
    %c0_46 = arith.constant 0 : index
    %c0_47 = arith.constant 0 : index
    %76 = vector.load %arg4[%c2, %c0_46, %c0_47] : memref<4x32x32xbf16, #tpu.memory_space<vmem>>, vector<1x32x32xbf16>
    %77 = vector.shape_cast %76 : vector<1x32x32xbf16> to vector<32x32xbf16>
    %cst_48 = arith.constant dense<0.000000e+00> : vector<16x32xf32>
    %78 = tpu.matmul %0, %77, %cst_48 {dimension_numbers = #tpu.dot_dimension_numbers<[1], [0], [0], [1], [0, 0, 1, 1], [], []>} : vector<16x32xbf16>, vector<32x32xbf16>, vector<16x32xf32> -> vector<16x32xf32>
    %c2_49 = arith.constant 2 : index
    %c0_50 = arith.constant 0 : index
    %c0_51 = arith.constant 0 : index
    %79 = vector.load %arg5[%c2_49, %c0_50, %c0_51] : memref<4x32x32xbf16, #tpu.memory_space<vmem>>, vector<1x32x32xbf16>
    %80 = vector.shape_cast %79 : vector<1x32x32xbf16> to vector<32x32xbf16>
    %cst_52 = arith.constant dense<0.000000e+00> : vector<16x32xf32>
    %81 = tpu.matmul %1, %80, %cst_52 {dimension_numbers = #tpu.dot_dimension_numbers<[1], [0], [0], [1], [0, 0, 1, 1], [], []>} : vector<16x32xbf16>, vector<32x32xbf16>, vector<16x32xf32> -> vector<16x32xf32>
    %c2_53 = arith.constant 2 : index
    %c0_54 = arith.constant 0 : index
    %c0_55 = arith.constant 0 : index
    %82 = vector.load %arg6[%c2_53, %c0_54, %c0_55] : memref<4x32x32xbf16, #tpu.memory_space<vmem>>, vector<1x32x32xbf16>
    %83 = vector.shape_cast %82 : vector<1x32x32xbf16> to vector<32x32xbf16>
    %cst_56 = arith.constant dense<0.000000e+00> : vector<16x32xf32>
    %84 = tpu.matmul %2, %83, %cst_56 {dimension_numbers = #tpu.dot_dimension_numbers<[1], [0], [0], [1], [0, 0, 1, 1], [], []>} : vector<16x32xbf16>, vector<32x32xbf16>, vector<16x32xf32> -> vector<16x32xf32>
    %85 = arith.truncf %78 : vector<16x32xf32> to vector<16x32xbf16>
    %86 = vector.shape_cast %85 : vector<16x32xbf16> to vector<2x8x32xbf16>
    %87 = arith.truncf %81 : vector<16x32xf32> to vector<16x32xbf16>
    %88 = vector.shape_cast %87 : vector<16x32xbf16> to vector<2x8x32xbf16>
    %89 = arith.truncf %84 : vector<16x32xf32> to vector<16x32xbf16>
    %90 = vector.shape_cast %89 : vector<16x32xbf16> to vector<2x8x32xbf16>
    "tpu.trace_start"() <{level = 10 : i32, message = "gfd,gkd->gfk"}> : () -> ()
    %cst_57 = arith.constant dense<0.000000e+00> : vector<2x8x8xf32>
    %91 = tpu.matmul %86, %88, %cst_57 {dimension_numbers = #tpu.dot_dimension_numbers<[2], [2], [1], [1], [0, 0, 0, 1, 1, 1], [0], [0]>} : vector<2x8x32xbf16>, vector<2x8x32xbf16>, vector<2x8x8xf32> -> vector<2x8x8xf32>
    "tpu.trace_stop"() : () -> ()
    %cst_58 = arith.constant 0.176776692 : f32
    %92 = vector.broadcast %cst_58 : f32 to vector<2x8x8xf32>
    %93 = arith.mulf %91, %92 : vector<2x8x8xf32>
    %cst_59 = arith.constant dense<0xFF800000> : vector<2x8xf32>
    %94 = vector.multi_reduction <maximumf>, %93, %cst_59 [2] : vector<2x8x8xf32> to vector<2x8xf32>
    %95 = vector.shape_cast %94 : vector<2x8xf32> to vector<2x8x1xf32>
    %96 = vector.broadcast %95 : vector<2x8x1xf32> to vector<2x8x8xf32>
    %97 = arith.subf %93, %96 : vector<2x8x8xf32>
    %98 = math.exp %97 : vector<2x8x8xf32>
    %cst_60 = arith.constant dense<0.000000e+00> : vector<2x8xf32>
    %99 = vector.multi_reduction <add>, %98, %cst_60 [2] : vector<2x8x8xf32> to vector<2x8xf32>
    %100 = vector.shape_cast %99 : vector<2x8xf32> to vector<2x8x1xf32>
    %101 = tpu.reciprocal %100 {approx = true} : vector<2x8x1xf32> -> vector<2x8x1xf32>
    %102 = vector.broadcast %101 : vector<2x8x1xf32> to vector<2x8x8xf32>
    %103 = arith.mulf %98, %102 : vector<2x8x8xf32>
    %104 = arith.truncf %103 : vector<2x8x8xf32> to vector<2x8x8xbf16>
    "tpu.trace_start"() <{level = 10 : i32, message = "gfk,gkd->gfd"}> : () -> ()
    %cst_61 = arith.constant dense<0.000000e+00> : vector<2x8x32xf32>
    %105 = tpu.matmul %104, %90, %cst_61 {dimension_numbers = #tpu.dot_dimension_numbers<[2], [1], [1], [2], [0, 0, 0, 1, 1, 2], [0], [0]>} : vector<2x8x8xbf16>, vector<2x8x32xbf16>, vector<2x8x32xf32> -> vector<2x8x32xf32>
    "tpu.trace_stop"() : () -> ()
    %106 = vector.shape_cast %105 : vector<2x8x32xf32> to vector<16x32xf32>
    %107 = arith.truncf %106 : vector<16x32xf32> to vector<16x32xbf16>
    %c2_62 = arith.constant 2 : index
    %c0_63 = arith.constant 0 : index
    %c0_64 = arith.constant 0 : index
    %108 = vector.load %arg7[%c2_62, %c0_63, %c0_64] : memref<4x32x32xbf16, #tpu.memory_space<vmem>>, vector<1x32x32xbf16>
    %109 = vector.shape_cast %108 : vector<1x32x32xbf16> to vector<32x32xbf16>
    %cst_65 = arith.constant dense<0.000000e+00> : vector<16x32xf32>
    %110 = tpu.matmul %107, %109, %cst_65 {dimension_numbers = #tpu.dot_dimension_numbers<[1], [0], [0], [1], [0, 0, 1, 1], [], []>} : vector<16x32xbf16>, vector<32x32xbf16>, vector<16x32xf32> -> vector<16x32xf32>
    %111 = arith.addf %75, %110 : vector<16x32xf32>
    %c3 = arith.constant 3 : index
    %c0_66 = arith.constant 0 : index
    %c0_67 = arith.constant 0 : index
    %112 = vector.load %arg4[%c3, %c0_66, %c0_67] : memref<4x32x32xbf16, #tpu.memory_space<vmem>>, vector<1x32x32xbf16>
    %113 = vector.shape_cast %112 : vector<1x32x32xbf16> to vector<32x32xbf16>
    %cst_68 = arith.constant dense<0.000000e+00> : vector<16x32xf32>
    %114 = tpu.matmul %0, %113, %cst_68 {dimension_numbers = #tpu.dot_dimension_numbers<[1], [0], [0], [1], [0, 0, 1, 1], [], []>} : vector<16x32xbf16>, vector<32x32xbf16>, vector<16x32xf32> -> vector<16x32xf32>
    %c3_69 = arith.constant 3 : index
    %c0_70 = arith.constant 0 : index
    %c0_71 = arith.constant 0 : index
    %115 = vector.load %arg5[%c3_69, %c0_70, %c0_71] : memref<4x32x32xbf16, #tpu.memory_space<vmem>>, vector<1x32x32xbf16>
    %116 = vector.shape_cast %115 : vector<1x32x32xbf16> to vector<32x32xbf16>
    %cst_72 = arith.constant dense<0.000000e+00> : vector<16x32xf32>
    %117 = tpu.matmul %1, %116, %cst_72 {dimension_numbers = #tpu.dot_dimension_numbers<[1], [0], [0], [1], [0, 0, 1, 1], [], []>} : vector<16x32xbf16>, vector<32x32xbf16>, vector<16x32xf32> -> vector<16x32xf32>
    %c3_73 = arith.constant 3 : index
    %c0_74 = arith.constant 0 : index
    %c0_75 = arith.constant 0 : index
    %118 = vector.load %arg6[%c3_73, %c0_74, %c0_75] : memref<4x32x32xbf16, #tpu.memory_space<vmem>>, vector<1x32x32xbf16>
    %119 = vector.shape_cast %118 : vector<1x32x32xbf16> to vector<32x32xbf16>
    %cst_76 = arith.constant dense<0.000000e+00> : vector<16x32xf32>
    %120 = tpu.matmul %2, %119, %cst_76 {dimension_numbers = #tpu.dot_dimension_numbers<[1], [0], [0], [1], [0, 0, 1, 1], [], []>} : vector<16x32xbf16>, vector<32x32xbf16>, vector<16x32xf32> -> vector<16x32xf32>
    %121 = arith.truncf %114 : vector<16x32xf32> to vector<16x32xbf16>
    %122 = vector.shape_cast %121 : vector<16x32xbf16> to vector<2x8x32xbf16>
    %123 = arith.truncf %117 : vector<16x32xf32> to vector<16x32xbf16>
    %124 = vector.shape_cast %123 : vector<16x32xbf16> to vector<2x8x32xbf16>
    %125 = arith.truncf %120 : vector<16x32xf32> to vector<16x32xbf16>
    %126 = vector.shape_cast %125 : vector<16x32xbf16> to vector<2x8x32xbf16>
    "tpu.trace_start"() <{level = 10 : i32, message = "gfd,gkd->gfk"}> : () -> ()
    %cst_77 = arith.constant dense<0.000000e+00> : vector<2x8x8xf32>
    %127 = tpu.matmul %122, %124, %cst_77 {dimension_numbers = #tpu.dot_dimension_numbers<[2], [2], [1], [1], [0, 0, 0, 1, 1, 1], [0], [0]>} : vector<2x8x32xbf16>, vector<2x8x32xbf16>, vector<2x8x8xf32> -> vector<2x8x8xf32>
    "tpu.trace_stop"() : () -> ()
    %cst_78 = arith.constant 0.176776692 : f32
    %128 = vector.broadcast %cst_78 : f32 to vector<2x8x8xf32>
    %129 = arith.mulf %127, %128 : vector<2x8x8xf32>
    %cst_79 = arith.constant dense<0xFF800000> : vector<2x8xf32>
    %130 = vector.multi_reduction <maximumf>, %129, %cst_79 [2] : vector<2x8x8xf32> to vector<2x8xf32>
    %131 = vector.shape_cast %130 : vector<2x8xf32> to vector<2x8x1xf32>
    %132 = vector.broadcast %131 : vector<2x8x1xf32> to vector<2x8x8xf32>
    %133 = arith.subf %129, %132 : vector<2x8x8xf32>
    %134 = math.exp %133 : vector<2x8x8xf32>
    %cst_80 = arith.constant dense<0.000000e+00> : vector<2x8xf32>
    %135 = vector.multi_reduction <add>, %134, %cst_80 [2] : vector<2x8x8xf32> to vector<2x8xf32>
    %136 = vector.shape_cast %135 : vector<2x8xf32> to vector<2x8x1xf32>
    %137 = tpu.reciprocal %136 {approx = true} : vector<2x8x1xf32> -> vector<2x8x1xf32>
    %138 = vector.broadcast %137 : vector<2x8x1xf32> to vector<2x8x8xf32>
    %139 = arith.mulf %134, %138 : vector<2x8x8xf32>
    %140 = arith.truncf %139 : vector<2x8x8xf32> to vector<2x8x8xbf16>
    "tpu.trace_start"() <{level = 10 : i32, message = "gfk,gkd->gfd"}> : () -> ()
    %cst_81 = arith.constant dense<0.000000e+00> : vector<2x8x32xf32>
    %141 = tpu.matmul %140, %126, %cst_81 {dimension_numbers = #tpu.dot_dimension_numbers<[2], [1], [1], [2], [0, 0, 0, 1, 1, 2], [0], [0]>} : vector<2x8x8xbf16>, vector<2x8x32xbf16>, vector<2x8x32xf32> -> vector<2x8x32xf32>
    "tpu.trace_stop"() : () -> ()
    %142 = vector.shape_cast %141 : vector<2x8x32xf32> to vector<16x32xf32>
    %143 = arith.truncf %142 : vector<16x32xf32> to vector<16x32xbf16>
    %c3_82 = arith.constant 3 : index
    %c0_83 = arith.constant 0 : index
    %c0_84 = arith.constant 0 : index
    %144 = vector.load %arg7[%c3_82, %c0_83, %c0_84] : memref<4x32x32xbf16, #tpu.memory_space<vmem>>, vector<1x32x32xbf16>
    %145 = vector.shape_cast %144 : vector<1x32x32xbf16> to vector<32x32xbf16>
    %cst_85 = arith.constant dense<0.000000e+00> : vector<16x32xf32>
    %146 = tpu.matmul %143, %145, %cst_85 {dimension_numbers = #tpu.dot_dimension_numbers<[1], [0], [0], [1], [0, 0, 1, 1], [], []>} : vector<16x32xbf16>, vector<32x32xbf16>, vector<16x32xf32> -> vector<16x32xf32>
    %147 = arith.addf %111, %146 : vector<16x32xf32>
    %c0_86 = arith.constant 0 : index
    %c0_87 = arith.constant 0 : index
    %148 = vector.load %arg8[%c0_86, %c0_87] : memref<16x32xf32, #tpu.memory_space<vmem>>, vector<16x32xf32>
    tpu.vector_store %arg8[%c0_86, %c0_87], %147 {strides = array<i32>} : memref<16x32xf32, #tpu.memory_space<vmem>>, vector<16x32xf32>,
    return
  }
  func.func @transform_0(%arg0: i32) -> (i32, i32) {
    %c0_i32 = arith.constant 0 : i32
    %c0_i32_0 = arith.constant 0 : i32
    return %arg0, %c0_i32 : i32, i32
  }
  func.func @transform_1(%arg0: i32) -> (i32, i32) {
    %c0_i32 = arith.constant 0 : i32
    %c0_i32_0 = arith.constant 0 : i32
    return %arg0, %c0_i32 : i32, i32
  }
  func.func @transform_2(%arg0: i32) -> (i32, i32) {
    %c0_i32 = arith.constant 0 : i32
    %c0_i32_0 = arith.constant 0 : i32
    return %arg0, %c0_i32 : i32, i32
  }
  func.func @transform_3(%arg0: i32) -> (i32, i32, i32) {
    %c0_i32 = arith.constant 0 : i32
    %c0_i32_0 = arith.constant 0 : i32
    %c0_i32_1 = arith.constant 0 : i32
    %c0_i32_2 = arith.constant 0 : i32
    return %c0_i32, %c0_i32_0, %c0_i32_1 : i32, i32, i32
  }
  func.func @transform_4(%arg0: i32) -> (i32, i32, i32) {
    %c0_i32 = arith.constant 0 : i32
    %c0_i32_0 = arith.constant 0 : i32
    %c0_i32_1 = arith.constant 0 : i32
    %c0_i32_2 = arith.constant 0 : i32
    return %c0_i32, %c0_i32_0, %c0_i32_1 : i32, i32, i32
  }
  func.func @transform_5(%arg0: i32) -> (i32, i32, i32) {
    %c0_i32 = arith.constant 0 : i32
    %c0_i32_0 = arith.constant 0 : i32
    %c0_i32_1 = arith.constant 0 : i32
    %c0_i32_2 = arith.constant 0 : i32
    return %c0_i32, %c0_i32_0, %c0_i32_1 : i32, i32, i32
  }
  func.func @transform_6(%arg0: i32) -> (i32, i32, i32) {
    %c0_i32 = arith.constant 0 : i32
    %c0_i32_0 = arith.constant 0 : i32
    %c0_i32_1 = arith.constant 0 : i32
    %c0_i32_2 = arith.constant 0 : i32
    return %c0_i32, %c0_i32_0, %c0_i32_1 : i32, i32, i32
  }
  func.func @transform_7(%arg0: i32) -> (i32, i32) {
    %c0_i32 = arith.constant 0 : i32
    %c0_i32_0 = arith.constant 0 : i32
    return %arg0, %c0_i32 : i32, i32
  }
}

</mosaic_0001>

<llo_original>
// kernel: tpu_custom_call.1
$region0: #{tpu_custom_call.1}
  #allocation0 [shape = 'u32[]', space=smem, size = 0x4, offset = 0x4, fixed_abs, tag = 'smem constant byte address 0x4 - core index']
  #allocation1 [shape = 'u32[144,128]{1,0:T(1,128)}', space=vmem, size = 0x12000, scoped, tag = 'internal scratch']
  %s0 = inlined_call_operand.hbm [shape: bf16[32,32], index: 0, kind: input, shape index: {}]
  %s1 = inlined_call_operand.hbm [shape: bf16[32,32], index: 1, kind: input, shape index: {}]
  %s2 = inlined_call_operand.hbm [shape: bf16[32,32], index: 2, kind: input, shape index: {}]
  %s3 = inlined_call_operand.hbm [shape: bf16[4,32,32], index: 3, kind: input, shape index: {}]
  %s4 = inlined_call_operand.hbm [shape: bf16[4,32,32], index: 4, kind: input, shape index: {}]
  %s5 = inlined_call_operand.hbm [shape: bf16[4,32,32], index: 5, kind: input, shape index: {}]
  %s6 = inlined_call_operand.hbm [shape: bf16[4,32,32], index: 6, kind: input, shape index: {}]
  %s7 = inlined_call_operand.hbm [shape: f32[32,32], index: 7, kind: output, shape index: {}]
  %s8 = sld [smem:[#allocation0]]
  $region89: #{tpu_custom_call.1} parent=0
    _
  %s10 = ssub.s32 1, %s8
  %s11 = scalar_select 0, %s10, %s8
  $region1: #{tpu_custom_call.1} parent=0
    #allocation2 [shape = 'u8[8192]{0}', space=vmem, size = 0x2000, scoped, tag = 'input window, operand 0']
    #allocation3 [shape = 's32[2]{0}', space=sflag, size = 0x8, scoped, tag = 'scoped memory for tpu_custom_call.1']
    #allocation4 [shape = 's32[2]{0}', space=sflag, size = 0x8, scoped, tag = 'scoped memory for tpu_custom_call.1']
    #allocation5 [shape = 'u8[8192]{0}', space=vmem, size = 0x2000, scoped, tag = 'input window, operand 1']
    #allocation6 [shape = 's32[2]{0}', space=sflag, size = 0x8, scoped, tag = 'scoped memory for tpu_custom_call.1']
    #allocation7 [shape = 'u8[8192]{0}', space=vmem, size = 0x2000, scoped, tag = 'input window, operand 2']
    #allocation8 [shape = 'u8[32768]{0}', space=vmem, size = 0x8000, scoped, tag = 'input window, operand 3, single buffered']
    #allocation9 [shape = 's32[1]{0}', space=sflag, size = 0x4, scoped, tag = 'scoped memory for tpu_custom_call.1']
    #allocation10 [shape = 'u8[32768]{0}', space=vmem, size = 0x8000, scoped, tag = 'input window, operand 4, single buffered']
    #allocation11 [shape = 'u8[32768]{0}', space=vmem, size = 0x8000, scoped, tag = 'input window, operand 5, single buffered']
    #allocation12 [shape = 's32[1]{0}', space=sflag, size = 0x4, scoped, tag = 'scoped memory for tpu_custom_call.1']
    #allocation13 [shape = 'u8[32768]{0}', space=vmem, size = 0x8000, scoped, tag = 'input window, operand 6, single buffered']
    #allocation14 [shape = 'u8[16384]{0}', space=vmem, size = 0x4000, scoped, tag = 'output window, operand 0']
    %12 = vsyncpa [#allocation3], 0
    %s13 = scalar_lea.sflag [#allocation3], 1
    %14 = vsyncpa %s13, 0
    %15 = vsyncpa [#allocation6], 0
    %s16 = scalar_lea.sflag [#allocation6], 1
    %17 = vsyncpa %s16, 0
    %18 = vsyncpa [#allocation9], 0
    %19 = vsyncpa [#allocation12], 0
    %20 = vsyncpa [#allocation4], 0
    %s21 = scalar_lea.sflag [#allocation4], 1
    %22 = vsyncpa %s21, 0
    loop: start=0, step=1, limit=4
    $region2: #{tpu_custom_call.1} parent=1 // loop_pre_header
      _
    $region3: #{tpu_custom_call.1} parent=1 // loop_header
      %s24 = sphi 0, %s28
      %p25 = scmp.ge.s32.totalorder %s24, 4
      %s34 = sphi 0, %s36
      %s37 = sphi 0, %s34
      %s38 = sphi 0, %s37
      %s54 = sphi 0, %s38
      %s60 = sphi 0, %s62
      %s63 = sphi 0, %s60
      %s64 = sphi 0, %s63
      %s80 = sphi 0, %s64
      %s86 = sphi 0, %s88
      %s89 = sphi 0, %s86
      %s90 = sphi 0, %s89
      %s106 = sphi 0, %s90
      %s110 = sphi 0, %s110
      %s112 = sphi 0, %s110
      %s113 = sphi 0, %s112
      %s127 = sphi 0, %s113
      %s131 = sphi 0, %s131
      %s133 = sphi 0, %s131
      %s134 = sphi 0, %s133
      %s148 = sphi 0, %s134
      %s152 = sphi 0, %s152
      %s154 = sphi 0, %s152
      %s155 = sphi 0, %s154
      %s169 = sphi 0, %s155
      %s173 = sphi 0, %s173
      %s175 = sphi 0, %s173
      %s176 = sphi 0, %s175
      %s190 = sphi 0, %s176
      %s196 = sphi 0, %s198
      %s199 = sphi 0, %s196
      %s200 = sphi 0, %s199
      %s216 = sphi 0, %s200
    $region4: #{tpu_custom_call.1} parent=1 // loop_header_branch
      %27 = sbr.rel (%p25) target = $region8
    $region5: #{tpu_custom_call.1} parent=1 // loop_body
      %s29 = ssub.s32 %s24, 1
      %s30 = ssub.s32 %s24, 2
      %s31 = sadd.s32 %s24, 1
      %s32 = ssub.s32 %s24, %s31
      %p33 = scmp.eq.s32.totalorder %s32, 0
      %s35 = sadd.s32 %s34, 1
      %s36 = scalar_select %p33, %s34, %s35
      %p39 = pneg %p33
      %p40 = scmp.eq.s32.totalorder %s24, 1
      %p41 = por %p39, %p40
      %p42 = scmp.ne.s32.totalorder %s34, %s37
      %p43 = scmp.eq.s32.totalorder %s24, 0
      %p44 = por %p42, %p43
      %p45 = scmp.ne.s32.totalorder %s34, %s37
      %p46 = scmp.eq.s32.totalorder %s29, 1
      %p47 = por %p45, %p46
      %p48 = scmp.ne.s32.totalorder %s37, %s38
      %p49 = scmp.eq.s32.totalorder %s29, 0
      %p50 = por %p48, %p49
      %p51 = scmp.ne.s32.totalorder %s37, %s38
      %p52 = scmp.eq.s32.totalorder %s30, 1
      %p53 = por %p51, %p52
      %p55 = scmp.ne.s32.totalorder %s38, %s54
      %p56 = scmp.eq.s32.totalorder %s30, 0
      %p57 = por %p55, %p56
      %s58 = ssub.s32 %s24, %s31
      %p59 = scmp.eq.s32.totalorder %s58, 0
      %s61 = sadd.s32 %s60, 1
      %s62 = scalar_select %p59, %s60, %s61
      %p65 = pneg %p59
      %p66 = scmp.eq.s32.totalorder %s24, 1
      %p67 = por %p65, %p66
      %p68 = scmp.ne.s32.totalorder %s60, %s63
      %p69 = scmp.eq.s32.totalorder %s24, 0
      %p70 = por %p68, %p69
      %p71 = scmp.ne.s32.totalorder %s60, %s63
      %p72 = scmp.eq.s32.totalorder %s29, 1
      %p73 = por %p71, %p72
      %p74 = scmp.ne.s32.totalorder %s63, %s64
      %p75 = scmp.eq.s32.totalorder %s29, 0
      %p76 = por %p74, %p75
      %p77 = scmp.ne.s32.totalorder %s63, %s64
      %p78 = scmp.eq.s32.totalorder %s30, 1
      %p79 = por %p77, %p78
      %p81 = scmp.ne.s32.totalorder %s64, %s80
      %p82 = scmp.eq.s32.totalorder %s30, 0
      %p83 = por %p81, %p82
      %s84 = ssub.s32 %s24, %s31
      %p85 = scmp.eq.s32.totalorder %s84, 0
      %s87 = sadd.s32 %s86, 1
      %s88 = scalar_select %p85, %s86, %s87
      %p91 = pneg %p85
      %p92 = scmp.eq.s32.totalorder %s24, 1
      %p93 = por %p91, %p92
      %p94 = scmp.ne.s32.totalorder %s86, %s89
      %p95 = scmp.eq.s32.totalorder %s24, 0
      %p96 = por %p94, %p95
      %p97 = scmp.ne.s32.totalorder %s86, %s89
      %p98 = scmp.eq.s32.totalorder %s29, 1
      %p99 = por %p97, %p98
      %p100 = scmp.ne.s32.totalorder %s89, %s90
      %p101 = scmp.eq.s32.totalorder %s29, 0
      %p102 = por %p100, %p101
      %p103 = scmp.ne.s32.totalorder %s89, %s90
      %p104 = scmp.eq.s32.totalorder %s30, 1
      %p105 = por %p103, %p104
      %p107 = scmp.ne.s32.totalorder %s90, %s106
      %p108 = scmp.eq.s32.totalorder %s30, 0
      %p109 = por %p107, %p108
      %s111 = sadd.s32 %s110, 1
      %p114 = scmp.eq.s32.totalorder %s24, 1
      %p115 = scmp.ne.s32.totalorder %s110, %s112
      %p116 = scmp.eq.s32.totalorder %s24, 0
      %p117 = por %p115, %p116
      %p118 = scmp.ne.s32.totalorder %s110, %s112
      %p119 = scmp.eq.s32.totalorder %s29, 1
      %p120 = por %p118, %p119
      %p121 = scmp.ne.s32.totalorder %s112, %s113
      %p122 = scmp.eq.s32.totalorder %s29, 0
      %p123 = por %p121, %p122
      %p124 = scmp.ne.s32.totalorder %s112, %s113
      %p125 = scmp.eq.s32.totalorder %s30, 1
      %p126 = por %p124, %p125
      %p128 = scmp.ne.s32.totalorder %s113, %s127
      %p129 = scmp.eq.s32.totalorder %s30, 0
      %p130 = por %p128, %p129
      %s132 = sadd.s32 %s131, 1
      %p135 = scmp.eq.s32.totalorder %s24, 1
      %p136 = scmp.ne.s32.totalorder %s131, %s133
      %p137 = scmp.eq.s32.totalorder %s24, 0
      %p138 = por %p136, %p137
      %p139 = scmp.ne.s32.totalorder %s131, %s133
      %p140 = scmp.eq.s32.totalorder %s29, 1
      %p141 = por %p139, %p140
      %p142 = scmp.ne.s32.totalorder %s133, %s134
      %p143 = scmp.eq.s32.totalorder %s29, 0
      %p144 = por %p142, %p143
      %p145 = scmp.ne.s32.totalorder %s133, %s134
      %p146 = scmp.eq.s32.totalorder %s30, 1
      %p147 = por %p145, %p146
      %p149 = scmp.ne.s32.totalorder %s134, %s148
      %p150 = scmp.eq.s32.totalorder %s30, 0
      %p151 = por %p149, %p150
      %s153 = sadd.s32 %s152, 1
      %p156 = scmp.eq.s32.totalorder %s24, 1
      %p157 = scmp.ne.s32.totalorder %s152, %s154
      %p158 = scmp.eq.s32.totalorder %s24, 0
      %p159 = por %p157, %p158
      %p160 = scmp.ne.s32.totalorder %s152, %s154
      %p161 = scmp.eq.s32.totalorder %s29, 1
      %p162 = por %p160, %p161
      %p163 = scmp.ne.s32.totalorder %s154, %s155
      %p164 = scmp.eq.s32.totalorder %s29, 0
      %p165 = por %p163, %p164
      %p166 = scmp.ne.s32.totalorder %s154, %s155
      %p167 = scmp.eq.s32.totalorder %s30, 1
      %p168 = por %p166, %p167
      %p170 = scmp.ne.s32.totalorder %s155, %s169
      %p171 = scmp.eq.s32.totalorder %s30, 0
      %p172 = por %p170, %p171
      %s174 = sadd.s32 %s173, 1
      %p177 = scmp.eq.s32.totalorder %s24, 1
      %p178 = scmp.ne.s32.totalorder %s173, %s175
      %p179 = scmp.eq.s32.totalorder %s24, 0
      %p180 = por %p178, %p179
      %p181 = scmp.ne.s32.totalorder %s173, %s175
      %p182 = scmp.eq.s32.totalorder %s29, 1
      %p183 = por %p181, %p182
      %p184 = scmp.ne.s32.totalorder %s175, %s176
      %p185 = scmp.eq.s32.totalorder %s29, 0
      %p186 = por %p184, %p185
      %p187 = scmp.ne.s32.totalorder %s175, %s176
      %p188 = scmp.eq.s32.totalorder %s30, 1
      %p189 = por %p187, %p188
      %p191 = scmp.ne.s32.totalorder %s176, %s190
      %p192 = scmp.eq.s32.totalorder %s30, 0
      %p193 = por %p191, %p192
      %s194 = ssub.s32 %s24, %s31
      %p195 = scmp.eq.s32.totalorder %s194, 0
      %s197 = sadd.s32 %s196, 1
      %s198 = scalar_select %p195, %s196, %s197
      %p201 = pneg %p195
      %p202 = scmp.eq.s32.totalorder %s24, 1
      %p203 = por %p201, %p202
      %p204 = scmp.ne.s32.totalorder %s196, %s199
      %p205 = scmp.eq.s32.totalorder %s24, 0
      %p206 = por %p204, %p205
      %p207 = scmp.ne.s32.totalorder %s196, %s199
      %p208 = scmp.eq.s32.totalorder %s29, 1
      %p209 = por %p207, %p208
      %p210 = scmp.ne.s32.totalorder %s199, %s200
      %p211 = scmp.eq.s32.totalorder %s29, 0
      %p212 = por %p210, %p211
      %p213 = scmp.ne.s32.totalorder %s199, %s200
      %p214 = scmp.eq.s32.totalorder %s30, 1
      %p215 = por %p213, %p214
      %p217 = scmp.ne.s32.totalorder %s200, %s216
      %p218 = scmp.eq.s32.totalorder %s30, 0
      %p219 = por %p217, %p218
      %p220 = scmp.le.s32.totalorder 1, %s24
      %p221 = scmp.lt.s32.totalorder %s24, 3
      %p222 = pnand %p220, %p221
      %p223 = pneg %p222
      // Predicated region
      $region9: #{tpu_custom_call.1} parent=5 // pred_check
        _
      $region10: #{tpu_custom_call.1} parent=5 // pred_check_branch
        %225 = sbr.rel (%p222) target = $region12
      $region11: #{tpu_custom_call.1} parent=5 // pred_region
        %s226 = ssub.s32 %s24, 1
        // Predicated region
        $region13: #{tpu_custom_call.1} parent=11 // pred_check
          %p227 = pneg %p123
        $region14: #{tpu_custom_call.1} parent=11 // pred_check_branch
          %229 = sbr.rel (%p227) target = $region16
        $region15: #{tpu_custom_call.1} parent=11 // pred_region
          %s231 = ssub.s32 1024, 1024
          %232 = vsyncadd [#allocation9], %s231
          %s233 = sshll.u32 [#allocation8], 4
          %s234 = int_to_ptr.vmem [resolvable:$true] %s233
          %239 = dma.hbm_to_vmem [thread:$0]  %s3, 1024, %s234, [#allocation9], 64, 64, 4
        $region16: #{tpu_custom_call.1} parent=11 // pred_fallthru
          _
        // Predicated region
        $region17: #{tpu_custom_call.1} parent=11 // pred_check
          %p240 = pneg %p144
        $region18: #{tpu_custom_call.1} parent=11 // pred_check_branch
          %242 = sbr.rel (%p240) target = $region20
        $region19: #{tpu_custom_call.1} parent=11 // pred_region
          %s244 = ssub.s32 1024, 1024
          %245 = vsyncadd [#allocation9], %s244
          %s246 = sshll.u32 [#allocation10], 4
          %s247 = int_to_ptr.vmem [resolvable:$true] %s246
          %252 = dma.hbm_to_vmem [thread:$0]  %s4, 1024, %s247, [#allocation9], 64, 64, 4
        $region20: #{tpu_custom_call.1} parent=11 // pred_fallthru
          _
        // Predicated region
        $region21: #{tpu_custom_call.1} parent=11 // pred_check
          %p253 = pneg %p165
        $region22: #{tpu_custom_call.1} parent=11 // pred_check_branch
          %255 = sbr.rel (%p253) target = $region24
        $region23: #{tpu_custom_call.1} parent=11 // pred_region
          %s257 = ssub.s32 1024, 1024
          %258 = vsyncadd [#allocation12], %s257
          %s259 = sshll.u32 [#allocation11], 4
          %s260 = int_to_ptr.vmem [resolvable:$true] %s259
          %265 = dma.hbm_to_vmem [thread:$0]  %s5, 1024, %s260, [#allocation12], 64, 64, 4
        $region24: #{tpu_custom_call.1} parent=11 // pred_fallthru
          _
        // Predicated region
        $region25: #{tpu_custom_call.1} parent=11 // pred_check
          %p266 = pneg %p186
        $region26: #{tpu_custom_call.1} parent=11 // pred_check_branch
          %268 = sbr.rel (%p266) target = $region28
        $region27: #{tpu_custom_call.1} parent=11 // pred_region
          %s270 = ssub.s32 1024, 1024
          %271 = vsyncadd [#allocation12], %s270
          %s272 = sshll.u32 [#allocation13], 4
          %s273 = int_to_ptr.vmem [resolvable:$true] %s272
          %278 = dma.hbm_to_vmem [thread:$0]  %s6, 1024, %s273, [#allocation12], 64, 64, 4
        $region28: #{tpu_custom_call.1} parent=11 // pred_fallthru
          _
      $region12: #{tpu_custom_call.1} parent=5 // pred_fallthru
        _
      %p279 = scmp.lt.s32.totalorder %s24, 2
      // Predicated region
      $region29: #{tpu_custom_call.1} parent=5 // pred_check
        %p280 = pneg %p279
      $region30: #{tpu_custom_call.1} parent=5 // pred_check_branch
        %282 = sbr.rel (%p280) target = $region32
      $region31: #{tpu_custom_call.1} parent=5 // pred_region
        // Predicated region
        $region33: #{tpu_custom_call.1} parent=31 // pred_check
          %p283 = pneg %p44
        $region34: #{tpu_custom_call.1} parent=31 // pred_check_branch
          %285 = sbr.rel (%p283) target = $region36
        $region35: #{tpu_custom_call.1} parent=31 // pred_region
          %s286 = sand.u32 %s34, 1
          %s287 = scalar_lea.sflag [#allocation3], %s286
          %s288 = sand.u32 %s34, 1
          %s289 = smul.addr %s288, 8
          %s290 = scalar_lea.vmem [#allocation2], %s289
          %s291 = smul.u32 2, %s24
          %s293 = ssub.s32 128, 128
          %294 = vsyncadd %s287, %s293
          %s295 = smul.addr %s291, 64
          %s296 = scalar_lea.hbm %s0, %s295
          %s297 = sshll.u32 %s290, 4
          %s298 = int_to_ptr.vmem [resolvable:$true] %s297
          %303 = dma.hbm_to_vmem [thread:$0]  %s296, 128, %s298, %s287, 64, 64, 4
        $region36: #{tpu_custom_call.1} parent=31 // pred_fallthru
          _
        // Predicated region
        $region37: #{tpu_custom_call.1} parent=31 // pred_check
          %p304 = pneg %p70
        $region38: #{tpu_custom_call.1} parent=31 // pred_check_branch
          %306 = sbr.rel (%p304) target = $region40
        $region39: #{tpu_custom_call.1} parent=31 // pred_region
          %s307 = sand.u32 %s24, 1
          %s308 = scalar_lea.sflag [#allocation6], %s307
          %s309 = sand.u32 %s60, 1
          %s310 = smul.addr %s309, 8
          %s311 = scalar_lea.vmem [#allocation5], %s310
          %s312 = smul.u32 2, %s24
          %s314 = ssub.s32 128, 128
          %315 = vsyncadd %s308, %s314
          %s316 = smul.addr %s312, 64
          %s317 = scalar_lea.hbm %s1, %s316
          %s318 = sshll.u32 %s311, 4
          %s319 = int_to_ptr.vmem [resolvable:$true] %s318
          %324 = dma.hbm_to_vmem [thread:$0]  %s317, 128, %s319, %s308, 64, 64, 4
        $region40: #{tpu_custom_call.1} parent=31 // pred_fallthru
          _
        // Predicated region
        $region41: #{tpu_custom_call.1} parent=31 // pred_check
          %p325 = pneg %p96
        $region42: #{tpu_custom_call.1} parent=31 // pred_check_branch
          %327 = sbr.rel (%p325) target = $region44
        $region43: #{tpu_custom_call.1} parent=31 // pred_region
          %s328 = sand.u32 %s24, 1
          %s329 = scalar_lea.sflag [#allocation6], %s328
          %s330 = sand.u32 %s86, 1
          %s331 = smul.addr %s330, 8
          %s332 = scalar_lea.vmem [#allocation7], %s331
          %s333 = smul.u32 2, %s24
          %s335 = ssub.s32 128, 128
          %336 = vsyncadd %s329, %s335
          %s337 = smul.addr %s333, 64
          %s338 = scalar_lea.hbm %s2, %s337
          %s339 = sshll.u32 %s332, 4
          %s340 = int_to_ptr.vmem [resolvable:$true] %s339
          %345 = dma.hbm_to_vmem [thread:$0]  %s338, 128, %s340, %s329, 64, 64, 4
        $region44: #{tpu_custom_call.1} parent=31 // pred_fallthru
          _
      $region32: #{tpu_custom_call.1} parent=5 // pred_fallthru
        _
      %p346 = scmp.le.s32.totalorder 1, %s24
      %p347 = scmp.lt.s32.totalorder %s24, 3
      %p348 = pnand %p346, %p347
      %p349 = pneg %p348
      // Predicated region
      $region45: #{tpu_custom_call.1} parent=5 // pred_check
        _
      $region46: #{tpu_custom_call.1} parent=5 // pred_check_branch
        %351 = sbr.rel (%p348) target = $region48
      $region47: #{tpu_custom_call.1} parent=5 // pred_region
        %s352 = ssub.s32 %s24, 1
        %s353 = sand.u32 %s37, 1
        %s354 = scalar_lea.sflag [#allocation3], %s353
        %s355 = sand.u32 %s37, 1
        %s356 = smul.addr %s355, 8
        %s357 = scalar_lea.vmem [#allocation2], %s356
        // Predicated region
        $region49: #{tpu_custom_call.1} parent=47 // pred_check
          %p358 = pneg %p50
        $region50: #{tpu_custom_call.1} parent=47 // pred_check_branch
          %360 = sbr.rel (%p358) target = $region52
        $region51: #{tpu_custom_call.1} parent=47 // pred_region
          %361 = dma.done %s354, 128
        $region52: #{tpu_custom_call.1} parent=47 // pred_fallthru
          _
        %s362 = sand.u32 %s29, 1
        %s363 = scalar_lea.sflag [#allocation6], %s362
        %s364 = sand.u32 %s63, 1
        %s365 = smul.addr %s364, 8
        %s366 = scalar_lea.vmem [#allocation5], %s365
        // Predicated region
        $region53: #{tpu_custom_call.1} parent=47 // pred_check
          %p367 = pneg %p76
        $region54: #{tpu_custom_call.1} parent=47 // pred_check_branch
          %369 = sbr.rel (%p367) target = $region56
        $region55: #{tpu_custom_call.1} parent=47 // pred_region
          %370 = dma.done %s363, 128
        $region56: #{tpu_custom_call.1} parent=47 // pred_fallthru
          _
        %s371 = sand.u32 %s29, 1
        %s372 = scalar_lea.sflag [#allocation6], %s371
        %s373 = sand.u32 %s89, 1
        %s374 = smul.addr %s373, 8
        %s375 = scalar_lea.vmem [#allocation7], %s374
        // Predicated region
        $region57: #{tpu_custom_call.1} parent=47 // pred_check
          %p376 = pneg %p102
        $region58: #{tpu_custom_call.1} parent=47 // pred_check_branch
          %378 = sbr.rel (%p376) target = $region60
        $region59: #{tpu_custom_call.1} parent=47 // pred_region
          %379 = dma.done %s372, 128
        $region60: #{tpu_custom_call.1} parent=47 // pred_fallthru
          _
        // Predicated region
        $region61: #{tpu_custom_call.1} parent=47 // pred_check
          %p380 = pneg %p123
        $region62: #{tpu_custom_call.1} parent=47 // pred_check_branch
          %382 = sbr.rel (%p380) target = $region64
        $region63: #{tpu_custom_call.1} parent=47 // pred_region
          %383 = dma.done [#allocation9], 1024
        $region64: #{tpu_custom_call.1} parent=47 // pred_fallthru
          _
        // Predicated region
        $region65: #{tpu_custom_call.1} parent=47 // pred_check
          %p384 = pneg %p144
        $region66: #{tpu_custom_call.1} parent=47 // pred_check_branch
          %386 = sbr.rel (%p384) target = $region68
        $region67: #{tpu_custom_call.1} parent=47 // pred_region
          %387 = dma.done [#allocation9], 1024
        $region68: #{tpu_custom_call.1} parent=47 // pred_fallthru
          _
        // Predicated region
        $region69: #{tpu_custom_call.1} parent=47 // pred_check
          %p388 = pneg %p165
        $region70: #{tpu_custom_call.1} parent=47 // pred_check_branch
          %390 = sbr.rel (%p388) target = $region72
        $region71: #{tpu_custom_call.1} parent=47 // pred_region
          %391 = dma.done [#allocation12], 1024
        $region72: #{tpu_custom_call.1} parent=47 // pred_fallthru
          _
        // Predicated region
        $region73: #{tpu_custom_call.1} parent=47 // pred_check
          %p392 = pneg %p186
        $region74: #{tpu_custom_call.1} parent=47 // pred_check_branch
          %394 = sbr.rel (%p392) target = $region76
        $region75: #{tpu_custom_call.1} parent=47 // pred_region
          %395 = dma.done [#allocation12], 1024
        $region76: #{tpu_custom_call.1} parent=47 // pred_fallthru
          _
        %s396 = sand.u32 %s37, 1
        %s397 = scalar_lea.sflag [#allocation3], %s396
        %s398 = sand.u32 %s37, 1
        %s399 = smul.addr %s398, 8
        %s400 = scalar_lea.vmem [#allocation2], %s399
        %p401 = pneg %p50
        %p402 = pneg %p47
        %s403 = sand.u32 %s29, 1
        %s404 = scalar_lea.sflag [#allocation6], %s403
        %s405 = sand.u32 %s63, 1
        %s406 = smul.addr %s405, 8
        %s407 = scalar_lea.vmem [#allocation5], %s406
        %p408 = pneg %p76
        %p409 = pneg %p73
        %s410 = sand.u32 %s29, 1
        %s411 = scalar_lea.sflag [#allocation6], %s410
        %s412 = sand.u32 %s89, 1
        %s413 = smul.addr %s412, 8
        %s414 = scalar_lea.vmem [#allocation7], %s413
        %p415 = pneg %p102
        %p416 = pneg %p99
        %p417 = pneg %p123
        %p418 = pneg %p120
        %p419 = pneg %p144
        %p420 = pneg %p141
        %p421 = pneg %p165
        %p422 = pneg %p162
        %p423 = pneg %p186
        %p424 = pneg %p183
        %p425 = pneg %p212
        %p426 = pneg %p209
        %s427 = sand.u32 %s199, 1
        %s428 = scalar_lea.sflag [#allocation4], %s427
        %s429 = sand.u32 %s199, 1
        %s430 = smul.addr %s429, 16
        %s431 = scalar_lea.vmem [#allocation14], %s430
        %s432 = smul.u32 2, %s29
        %s433 = smul.u32 2, %s29
        %s434 = smul.u32 2, %s29
        %s435 = smul.u32 2, %s29
        %v437 = vld [vmem:[%s357] sm:$0xf]
        %v438 = vld [vmem:[%s357 + $0x4] sm:$0xf]
        %v439 = vld [vmem:[%s366] sm:$0xf]
        %v440 = vld [vmem:[%s366 + $0x4] sm:$0xf]
        %v441 = vld [vmem:[%s375] sm:$0xf]
        %v442 = vld [vmem:[%s375 + $0x4] sm:$0xf]
        %v443 = vld [vmem:[#allocation8] sm:$0xf]
        %v444 = vld [vmem:[#allocation8 + $0x4] sm:$0xf]
        %v445 = vld [vmem:[#allocation8 + $0x8] sm:$0xf]
        %v446 = vld [vmem:[#allocation8 + $0xc] sm:$0xf]
        %v449 = vunpack.c.l.b16 %v437
        %v450 = vunpack.c.l.b16 %v438
        %v451 = vpack.c.b16 %v450, %v449
        %v456 = vunpack.c.l.b16 %v443
        %v457 = vunpack.c.l.b16 %v444
        %v458 = vunpack.c.l.b16 %v445
        %v459 = vunpack.c.l.b16 %v446
        %v460 = vpack.c.b16 %v457, %v456
        %v461 = vpack.c.b16 %v459, %v458
        %vm464 = vcmask 261120
        %v466 = vsel %vm464, %v451, 0
        %468 = vmatprep.subr.bf16.mxu0 0
        %469 = vmatpush1.bf16.msra.mxu0 %v460
        %470 = vmatprep.subr.bf16.mxu0 0
        %471 = vmatpush1.bf16.msra.mxu0 %v461
        %472 = vmatprep.subr.bf16.mxu0 0
        %473 = vmatpush1.bf16.msra.mxu0 0
        %474 = vmatprep.subr.bf16.mxu0 0
        %475 = vmatpush1.bf16.msra.mxu0 0
        %476 = vmatprep.subr.bf16.mxu0 0
        %477 = vmatpush1.bf16.msra.mxu0 0
        %478 = vmatprep.subr.bf16.mxu0 0
        %479 = vmatpush1.bf16.msra.mxu0 0
        %480 = vmatprep.subr.bf16.mxu0 0
        %481 = vmatpush1.bf16.msra.mxu0 0
        %482 = vmatprep.subr.bf16.mxu0 0
        %483 = vmatpush1.bf16.msra.mxu0 0
        %484 = vmatprep.subr.bf16.mxu0 0
        %485 = vmatpush1.bf16.msra.mxu0 0
        %486 = vmatprep.subr.bf16.mxu0 0
        %487 = vmatpush1.bf16.msra.mxu0 0
        %488 = vmatprep.subr.bf16.mxu0 0
        %489 = vmatpush1.bf16.msra.mxu0 0
        %490 = vmatprep.subr.bf16.mxu0 0
        %491 = vmatpush1.bf16.msra.mxu0 0
        %492 = vmatprep.subr.bf16.mxu0 0
        %493 = vmatpush1.bf16.msra.mxu0 0
        %494 = vmatprep.subr.bf16.mxu0 0
        %495 = vmatpush1.bf16.msra.mxu0 0
        %496 = vmatprep.subr.bf16.mxu0 0
        %497 = vmatpush1.bf16.msra.mxu0 0
        %498 = vmatprep.subr.bf16.mxu0 0
        %499 = vmatpush1.bf16.msra.mxu0 0
        %500 = vmatprep.mubr.bf16.mxu0 0
        %501 = vmatmul.mubr.bf16.gmra.mrb[0].mxu0 %v466
        %v502 = vpop.f32.mrb[0].mxu0
        %v503 = vadd.f32 0.0, %v502
        %v504 = vpop.f32.mrb[0].mxu0
        %v505 = vpop.f32.mrb[0].mxu0
        %v506 = vadd.f32 0.0, %v505
        %v507 = vpop.f32.mrb[0].mxu0
        %508 = vdwg.mxu0
        %v509 = vld [vmem:[#allocation10] sm:$0xf]
        %v510 = vld [vmem:[#allocation10 + $0x4] sm:$0xf]
        %v511 = vld [vmem:[#allocation10 + $0x8] sm:$0xf]
        %v512 = vld [vmem:[#allocation10 + $0xc] sm:$0xf]
        %v515 = vunpack.c.l.b16 %v439
        %v516 = vunpack.c.l.b16 %v440
        %v517 = vpack.c.b16 %v516, %v515
        %v522 = vunpack.c.l.b16 %v509
        %v523 = vunpack.c.l.b16 %v510
        %v524 = vunpack.c.l.b16 %v511
        %v525 = vunpack.c.l.b16 %v512
        %v526 = vpack.c.b16 %v523, %v522
        %v527 = vpack.c.b16 %v525, %v524
        %v531 = vsel %vm464, %v517, 0
        %533 = vmatprep.subr.bf16.mxu0 0
        %534 = vmatpush1.bf16.msra.mxu0 %v526
        %535 = vmatprep.subr.bf16.mxu0 0
        %536 = vmatpush1.bf16.msra.mxu0 %v527
        %537 = vmatprep.subr.bf16.mxu0 0
        %538 = vmatpush1.bf16.msra.mxu0 0
        %539 = vmatprep.subr.bf16.mxu0 0
        %540 = vmatpush1.bf16.msra.mxu0 0
        %541 = vmatprep.subr.bf16.mxu0 0
        %542 = vmatpush1.bf16.msra.mxu0 0
        %543 = vmatprep.subr.bf16.mxu0 0
        %544 = vmatpush1.bf16.msra.mxu0 0
        %545 = vmatprep.subr.bf16.mxu0 0
        %546 = vmatpush1.bf16.msra.mxu0 0
        %547 = vmatprep.subr.bf16.mxu0 0
        %548 = vmatpush1.bf16.msra.mxu0 0
        %549 = vmatprep.subr.bf16.mxu0 0
        %550 = vmatpush1.bf16.msra.mxu0 0
        %551 = vmatprep.subr.bf16.mxu0 0
        %552 = vmatpush1.bf16.msra.mxu0 0
        %553 = vmatprep.subr.bf16.mxu0 0
        %554 = vmatpush1.bf16.msra.mxu0 0
        %555 = vmatprep.subr.bf16.mxu0 0
        %556 = vmatpush1.bf16.msra.mxu0 0
        %557 = vmatprep.subr.bf16.mxu0 0
        %558 = vmatpush1.bf16.msra.mxu0 0
        %559 = vmatprep.subr.bf16.mxu0 0
        %560 = vmatpush1.bf16.msra.mxu0 0
        %561 = vmatprep.subr.bf16.mxu0 0
        %562 = vmatpush1.bf16.msra.mxu0 0
        %563 = vmatprep.subr.bf16.mxu0 0
        %564 = vmatpush1.bf16.msra.mxu0 0
        %565 = vmatprep.mubr.bf16.mxu0 0
        %566 = vmatmul.mubr.bf16.gmra.mrb[0].mxu0 %v531
        %v567 = vpop.f32.mrb[0].mxu0
        %v568 = vadd.f32 0.0, %v567
        %v569 = vpop.f32.mrb[0].mxu0
        %v570 = vpop.f32.mrb[0].mxu0
        %v571 = vadd.f32 0.0, %v570
        %v572 = vpop.f32.mrb[0].mxu0
        %573 = vdwg.mxu0
        %v574 = vld [vmem:[#allocation11] sm:$0xf]
        %v575 = vld [vmem:[#allocation11 + $0x4] sm:$0xf]
        %v576 = vld [vmem:[#allocation11 + $0x8] sm:$0xf]
        %v577 = vld [vmem:[#allocation11 + $0xc] sm:$0xf]
        %v580 = vunpack.c.l.b16 %v441
        %v581 = vunpack.c.l.b16 %v442
        %v582 = vpack.c.b16 %v581, %v580
        %v587 = vunpack.c.l.b16 %v574
        %v588 = vunpack.c.l.b16 %v575
        %v589 = vunpack.c.l.b16 %v576
        %v590 = vunpack.c.l.b16 %v577
        %v591 = vpack.c.b16 %v588, %v587
        %v592 = vpack.c.b16 %v590, %v589
        %v596 = vsel %vm464, %v582, 0
        %598 = vmatprep.subr.bf16.mxu0 0
        %599 = vmatpush1.bf16.msra.mxu0 %v591
        %600 = vmatprep.subr.bf16.mxu0 0
        %601 = vmatpush1.bf16.msra.mxu0 %v592
        %602 = vmatprep.subr.bf16.mxu0 0
        %603 = vmatpush1.bf16.msra.mxu0 0
        %604 = vmatprep.subr.bf16.mxu0 0
        %605 = vmatpush1.bf16.msra.mxu0 0
        %606 = vmatprep.subr.bf16.mxu0 0
        %607 = vmatpush1.bf16.msra.mxu0 0
        %608 = vmatprep.subr.bf16.mxu0 0
        %609 = vmatpush1.bf16.msra.mxu0 0
        %610 = vmatprep.subr.bf16.mxu0 0
        %611 = vmatpush1.bf16.msra.mxu0 0
        %612 = vmatprep.subr.bf16.mxu0 0
        %613 = vmatpush1.bf16.msra.mxu0 0
        %614 = vmatprep.subr.bf16.mxu0 0
        %615 = vmatpush1.bf16.msra.mxu0 0
        %616 = vmatprep.subr.bf16.mxu0 0
        %617 = vmatpush1.bf16.msra.mxu0 0
        %618 = vmatprep.subr.bf16.mxu0 0
        %619 = vmatpush1.bf16.msra.mxu0 0
        %620 = vmatprep.subr.bf16.mxu0 0
        %621 = vmatpush1.bf16.msra.mxu0 0
        %622 = vmatprep.subr.bf16.mxu0 0
        %623 = vmatpush1.bf16.msra.mxu0 0
        %624 = vmatprep.subr.bf16.mxu0 0
        %625 = vmatpush1.bf16.msra.mxu0 0
        %626 = vmatprep.subr.bf16.mxu0 0
        %627 = vmatpush1.bf16.msra.mxu0 0
        %628 = vmatprep.subr.bf16.mxu0 0
        %629 = vmatpush1.bf16.msra.mxu0 0
        %630 = vmatprep.mubr.bf16.mxu0 0
        %631 = vmatmul.mubr.bf16.gmra.mrb[0].mxu0 %v596
        %v632 = vpop.f32.mrb[0].mxu0
        %v633 = vadd.f32 0.0, %v632
        %v634 = vpop.f32.mrb[0].mxu0
        %v635 = vpop.f32.mrb[0].mxu0
        %v636 = vadd.f32 0.0, %v635
        %v637 = vpop.f32.mrb[0].mxu0
        %638 = vdwg.mxu0
        %v639 = vpack.c.bf16 %v506, %v503
        %v641 = vunpack.c.l.b16 %v639
        %v642 = vunpack.c.h.b16 %v639
        %v643 = vpack.c.b16 %v641, %v641
        %v644 = vpack.c.b16 %v642, %v642
        %v645 = vpack.c.bf16 %v571, %v568
        %v647 = vunpack.c.l.b16 %v645
        %v648 = vunpack.c.h.b16 %v645
        %v649 = vpack.c.b16 %v647, %v647
        %v650 = vpack.c.b16 %v648, %v648
        %v651 = vpack.c.bf16 %v636, %v633
        %v653 = vunpack.c.l.b16 %v651
        %v654 = vunpack.c.h.b16 %v651
        %v655 = vpack.c.b16 %v653, %v653
        %v656 = vpack.c.b16 %v654, %v654
        %v658 = vsel %vm464, %v643, 0
        %v661 = vsel %vm464, %v649, 0
        %663 = vmatprep.subr.bf16.mxu0 0
        %664 = vmatpush1.bf16.xpose.msra.mxu0 %v661
        %665 = vmatprep.subr.bf16.mxu0 0
        %666 = vmatpush1.bf16.xpose.msra.mxu0 0
        %667 = vmatprep.subr.bf16.mxu0 0
        %668 = vmatpush1.bf16.xpose.msra.mxu0 0
        %669 = vmatprep.subr.bf16.mxu0 0
        %670 = vmatpush1.bf16.xpose.msra.mxu0 0
        %671 = vmatprep.subr.bf16.mxu0 0
        %672 = vmatpush1.bf16.xpose.msra.mxu0 0
        %673 = vmatprep.subr.bf16.mxu0 0
        %674 = vmatpush1.bf16.xpose.msra.mxu0 0
        %675 = vmatprep.subr.bf16.mxu0 0
        %676 = vmatpush1.bf16.xpose.msra.mxu0 0
        %677 = vmatprep.subr.bf16.mxu0 0
        %678 = vmatpush1.bf16.xpose.msra.mxu0 0
        %679 = vmatprep.subr.bf16.mxu0 0
        %680 = vmatpush1.bf16.xpose.msra.mxu0 0
        %681 = vmatprep.subr.bf16.mxu0 0
        %682 = vmatpush1.bf16.xpose.msra.mxu0 0
        %683 = vmatprep.subr.bf16.mxu0 0
        %684 = vmatpush1.bf16.xpose.msra.mxu0 0
        %685 = vmatprep.subr.bf16.mxu0 0
        %686 = vmatpush1.bf16.xpose.msra.mxu0 0
        %687 = vmatprep.subr.bf16.mxu0 0
        %688 = vmatpush1.bf16.xpose.msra.mxu0 0
        %689 = vmatprep.subr.bf16.mxu0 0
        %690 = vmatpush1.bf16.xpose.msra.mxu0 0
        %691 = vmatprep.subr.bf16.mxu0 0
        %692 = vmatpush1.bf16.xpose.msra.mxu0 0
        %693 = vmatprep.subr.bf16.mxu0 0
        %694 = vmatpush1.bf16.xpose.msra.mxu0 0
        %695 = vmatprep.mubr.bf16.mxu0 0
        %696 = vmatmul.mubr.bf16.gmra.mrb[0].mxu0 %v658
        %v697 = vpop.f32.mrb[0].mxu0
        %v698 = vadd.f32 0.0, %v697
        %v699 = vpop.f32.mrb[0].mxu0
        %v700 = vpop.f32.mrb[0].mxu0
        %v701 = vpop.f32.mrb[0].mxu0
        %702 = vdwg.mxu0
        %v704 = vsel %vm464, %v644, 0
        %v707 = vsel %vm464, %v650, 0
        %709 = vmatprep.subr.bf16.mxu0 0
        %710 = vmatpush1.bf16.xpose.msra.mxu0 %v707
        %711 = vmatprep.subr.bf16.mxu0 0
        %712 = vmatpush1.bf16.xpose.msra.mxu0 0
        %713 = vmatprep.subr.bf16.mxu0 0
        %714 = vmatpush1.bf16.xpose.msra.mxu0 0
        %715 = vmatprep.subr.bf16.mxu0 0
        %716 = vmatpush1.bf16.xpose.msra.mxu0 0
        %717 = vmatprep.subr.bf16.mxu0 0
        %718 = vmatpush1.bf16.xpose.msra.mxu0 0
        %719 = vmatprep.subr.bf16.mxu0 0
        %720 = vmatpush1.bf16.xpose.msra.mxu0 0
        %721 = vmatprep.subr.bf16.mxu0 0
        %722 = vmatpush1.bf16.xpose.msra.mxu0 0
        %723 = vmatprep.subr.bf16.mxu0 0
        %724 = vmatpush1.bf16.xpose.msra.mxu0 0
        %725 = vmatprep.subr.bf16.mxu0 0
        %726 = vmatpush1.bf16.xpose.msra.mxu0 0
        %727 = vmatprep.subr.bf16.mxu0 0
        %728 = vmatpush1.bf16.xpose.msra.mxu0 0
        %729 = vmatprep.subr.bf16.mxu0 0
        %730 = vmatpush1.bf16.xpose.msra.mxu0 0
        %731 = vmatprep.subr.bf16.mxu0 0
        %732 = vmatpush1.bf16.xpose.msra.mxu0 0
        %733 = vmatprep.subr.bf16.mxu0 0
        %734 = vmatpush1.bf16.xpose.msra.mxu0 0
        %735 = vmatprep.subr.bf16.mxu0 0
        %736 = vmatpush1.bf16.xpose.msra.mxu0 0
        %737 = vmatprep.subr.bf16.mxu0 0
        %738 = vmatpush1.bf16.xpose.msra.mxu0 0
        %739 = vmatprep.subr.bf16.mxu0 0
        %740 = vmatpush1.bf16.xpose.msra.mxu0 0
        %741 = vmatprep.mubr.bf16.mxu0 0
        %742 = vmatmul.mubr.bf16.gmra.mrb[0].mxu0 %v704
        %v743 = vpop.f32.mrb[0].mxu0
        %v744 = vadd.f32 0.0, %v743
        %v745 = vpop.f32.mrb[0].mxu0
        %v746 = vpop.f32.mrb[0].mxu0
        %v747 = vpop.f32.mrb[0].mxu0
        %748 = vdwg.mxu0
        %v749 = vmul.f32 %v698, 0.17677669
        %v750 = vmul.f32 %v744, 0.17677669
        %vm751 = vcmask 64512
        %v752 = vsel %vm751, %v749, -inf
        %753 = vmax.xlane.f32.xlu0 %v752
        %v754 = vpop.xlane.xlu0 %753
        %v755 = vsel %vm751, %v750, -inf
        %756 = vmax.xlane.f32.xlu0 %v755
        %v757 = vpop.xlane.xlu0 %756
        %v758 = vsub.f32 %v749, %v754
        %v759 = vsub.f32 %v750, %v757
        %v760 = vmul.f32 %v758, 1.442695
        %v761 = vpow.pop %v760
        %v762 = vmul.f32 %v759, 1.442695
        %v763 = vpow.pop %v762
        %v764 = vsel %vm751, %v761, 0.0
        %765 = vadd.xlane.f32.xlu0 %v764
        %v766 = vpop.xlane.xlu0 %765
        %v767 = vsel %vm751, %v763, 0.0
        %768 = vadd.xlane.f32.xlu0 %v767
        %v769 = vpop.xlane.xlu0 %768
        %v770 = vrcp.pop %v766
        %v771 = vrcp.pop %v769
        %v772 = vmul.f32 %v761, %v770
        %v773 = vmul.f32 %v763, %v771
        %v774 = vpack.c.bf16 %v772, %v772
        %v775 = vpack.c.bf16 %v773, %v773
        %v777 = vsel %vm751, %v774, 0
        %vm779 = vcmask 1043456
        %v781 = vsel %vm779, %v655, 0
        %783 = vmatprep.subr.bf16.mxu0 0
        %784 = vmatpush1.bf16.msra.mxu0 %v781
        %785 = vmatprep.subr.bf16.mxu0 0
        %786 = vmatpush1.bf16.msra.mxu0 0
        %787 = vmatprep.subr.bf16.mxu0 0
        %788 = vmatpush1.bf16.msra.mxu0 0
        %789 = vmatprep.subr.bf16.mxu0 0
        %790 = vmatpush1.bf16.msra.mxu0 0
        %791 = vmatprep.subr.bf16.mxu0 0
        %792 = vmatpush1.bf16.msra.mxu0 0
        %793 = vmatprep.subr.bf16.mxu0 0
        %794 = vmatpush1.bf16.msra.mxu0 0
        %795 = vmatprep.subr.bf16.mxu0 0
        %796 = vmatpush1.bf16.msra.mxu0 0
        %797 = vmatprep.subr.bf16.mxu0 0
        %798 = vmatpush1.bf16.msra.mxu0 0
        %799 = vmatprep.subr.bf16.mxu0 0
        %800 = vmatpush1.bf16.msra.mxu0 0
        %801 = vmatprep.subr.bf16.mxu0 0
        %802 = vmatpush1.bf16.msra.mxu0 0
        %803 = vmatprep.subr.bf16.mxu0 0
        %804 = vmatpush1.bf16.msra.mxu0 0
        %805 = vmatprep.subr.bf16.mxu0 0
        %806 = vmatpush1.bf16.msra.mxu0 0
        %807 = vmatprep.subr.bf16.mxu0 0
        %808 = vmatpush1.bf16.msra.mxu0 0
        %809 = vmatprep.subr.bf16.mxu0 0
        %810 = vmatpush1.bf16.msra.mxu0 0
        %811 = vmatprep.subr.bf16.mxu0 0
        %812 = vmatpush1.bf16.msra.mxu0 0
        %813 = vmatprep.subr.bf16.mxu0 0
        %814 = vmatpush1.bf16.msra.mxu0 0
        %815 = vmatprep.mubr.bf16.mxu0 0
        %816 = vmatmul.mubr.bf16.gmra.mrb[0].mxu0 %v777
        %v817 = vpop.f32.mrb[0].mxu0
        %v818 = vadd.f32 0.0, %v817
        %v819 = vpop.f32.mrb[0].mxu0
        %v820 = vpop.f32.mrb[0].mxu0
        %v821 = vpop.f32.mrb[0].mxu0
        %822 = vdwg.mxu0
        %v824 = vsel %vm751, %v775, 0
        %v827 = vsel %vm779, %v656, 0
        %829 = vmatprep.subr.bf16.mxu0 0
        %830 = vmatpush1.bf16.msra.mxu0 %v827
        %831 = vmatprep.subr.bf16.mxu0 0
        %832 = vmatpush1.bf16.msra.mxu0 0
        %833 = vmatprep.subr.bf16.mxu0 0
        %834 = vmatpush1.bf16.msra.mxu0 0
        %835 = vmatprep.subr.bf16.mxu0 0
        %836 = vmatpush1.bf16.msra.mxu0 0
        %837 = vmatprep.subr.bf16.mxu0 0
        %838 = vmatpush1.bf16.msra.mxu0 0
        %839 = vmatprep.subr.bf16.mxu0 0
        %840 = vmatpush1.bf16.msra.mxu0 0
        %841 = vmatprep.subr.bf16.mxu0 0
        %842 = vmatpush1.bf16.msra.mxu0 0
        %843 = vmatprep.subr.bf16.mxu0 0
        %844 = vmatpush1.bf16.msra.mxu0 0
        %845 = vmatprep.subr.bf16.mxu0 0
        %846 = vmatpush1.bf16.msra.mxu0 0
        %847 = vmatprep.subr.bf16.mxu0 0
        %848 = vmatpush1.bf16.msra.mxu0 0
        %849 = vmatprep.subr.bf16.mxu0 0
        %850 = vmatpush1.bf16.msra.mxu0 0
        %851 = vmatprep.subr.bf16.mxu0 0
        %852 = vmatpush1.bf16.msra.mxu0 0
        %853 = vmatprep.subr.bf16.mxu0 0
        %854 = vmatpush1.bf16.msra.mxu0 0
        %855 = vmatprep.subr.bf16.mxu0 0
        %856 = vmatpush1.bf16.msra.mxu0 0
        %857 = vmatprep.subr.bf16.mxu0 0
        %858 = vmatpush1.bf16.msra.mxu0 0
        %859 = vmatprep.subr.bf16.mxu0 0
        %860 = vmatpush1.bf16.msra.mxu0 0
        %861 = vmatprep.mubr.bf16.mxu0 0
        %862 = vmatmul.mubr.bf16.gmra.mrb[0].mxu0 %v824
        %v863 = vpop.f32.mrb[0].mxu0
        %v864 = vadd.f32 0.0, %v863
        %v865 = vpop.f32.mrb[0].mxu0
        %v866 = vpop.f32.mrb[0].mxu0
        %v867 = vpop.f32.mrb[0].mxu0
        %868 = vdwg.mxu0
        %v869 = vpack.c.bf16 %v864, %v818
        %v870 = vld [vmem:[#allocation13] sm:$0xf]
        %v871 = vld [vmem:[#allocation13 + $0x4] sm:$0xf]
        %v872 = vld [vmem:[#allocation13 + $0x8] sm:$0xf]
        %v873 = vld [vmem:[#allocation13 + $0xc] sm:$0xf]
        %s874 = scalar_lea.vmem [#allocation8], 16
        %v875 = vld [vmem:[%s874] sm:$0xf]
        %v876 = vld [vmem:[%s874 + $0x4] sm:$0xf]
        %v877 = vld [vmem:[%s874 + $0x8] sm:$0xf]
        %v878 = vld [vmem:[%s874 + $0xc] sm:$0xf]
        %v883 = vunpack.c.l.b16 %v875
        %v884 = vunpack.c.l.b16 %v876
        %v885 = vunpack.c.l.b16 %v877
        %v886 = vunpack.c.l.b16 %v878
        %v887 = vpack.c.b16 %v884, %v883
        %v888 = vpack.c.b16 %v886, %v885
        %891 = vmatprep.subr.bf16.mxu0 0
        %892 = vmatpush1.bf16.msra.mxu0 %v887
        %893 = vmatprep.subr.bf16.mxu0 0
        %894 = vmatpush1.bf16.msra.mxu0 %v888
        %895 = vmatprep.subr.bf16.mxu0 0
        %896 = vmatpush1.bf16.msra.mxu0 0
        %897 = vmatprep.subr.bf16.mxu0 0
        %898 = vmatpush1.bf16.msra.mxu0 0
        %899 = vmatprep.subr.bf16.mxu0 0
        %900 = vmatpush1.bf16.msra.mxu0 0
        %901 = vmatprep.subr.bf16.mxu0 0
        %902 = vmatpush1.bf16.msra.mxu0 0
        %903 = vmatprep.subr.bf16.mxu0 0
        %904 = vmatpush1.bf16.msra.mxu0 0
        %905 = vmatprep.subr.bf16.mxu0 0
        %906 = vmatpush1.bf16.msra.mxu0 0
        %907 = vmatprep.subr.bf16.mxu0 0
        %908 = vmatpush1.bf16.msra.mxu0 0
        %909 = vmatprep.subr.bf16.mxu0 0
        %910 = vmatpush1.bf16.msra.mxu0 0
        %911 = vmatprep.subr.bf16.mxu0 0
        %912 = vmatpush1.bf16.msra.mxu0 0
        %913 = vmatprep.subr.bf16.mxu0 0
        %914 = vmatpush1.bf16.msra.mxu0 0
        %915 = vmatprep.subr.bf16.mxu0 0
        %916 = vmatpush1.bf16.msra.mxu0 0
        %917 = vmatprep.subr.bf16.mxu0 0
        %918 = vmatpush1.bf16.msra.mxu0 0
        %919 = vmatprep.subr.bf16.mxu0 0
        %920 = vmatpush1.bf16.msra.mxu0 0
        %921 = vmatprep.subr.bf16.mxu0 0
        %922 = vmatpush1.bf16.msra.mxu0 0
        %923 = vmatprep.mubr.bf16.mxu0 0
        %924 = vmatmul.mubr.bf16.gmra.mrb[0].mxu0 %v466
        %v925 = vpop.f32.mrb[0].mxu0
        %v926 = vadd.f32 0.0, %v925
        %v927 = vpop.f32.mrb[0].mxu0
        %v928 = vpop.f32.mrb[0].mxu0
        %v929 = vadd.f32 0.0, %v928
        %v930 = vpop.f32.mrb[0].mxu0
        %931 = vdwg.mxu0
        %s932 = scalar_lea.vmem [#allocation10], 16
        %v933 = vld [vmem:[%s932] sm:$0xf]
        %v934 = vld [vmem:[%s932 + $0x4] sm:$0xf]
        %v935 = vld [vmem:[%s932 + $0x8] sm:$0xf]
        %v936 = vld [vmem:[%s932 + $0xc] sm:$0xf]
        %v941 = vunpack.c.l.b16 %v933
        %v942 = vunpack.c.l.b16 %v934
        %v943 = vunpack.c.l.b16 %v935
        %v944 = vunpack.c.l.b16 %v936
        %v945 = vpack.c.b16 %v942, %v941
        %v946 = vpack.c.b16 %v944, %v943
        %949 = vmatprep.subr.bf16.mxu0 0
        %950 = vmatpush1.bf16.msra.mxu0 %v945
        %951 = vmatprep.subr.bf16.mxu0 0
        %952 = vmatpush1.bf16.msra.mxu0 %v946
        %953 = vmatprep.subr.bf16.mxu0 0
        %954 = vmatpush1.bf16.msra.mxu0 0
        %955 = vmatprep.subr.bf16.mxu0 0
        %956 = vmatpush1.bf16.msra.mxu0 0
        %957 = vmatprep.subr.bf16.mxu0 0
        %958 = vmatpush1.bf16.msra.mxu0 0
        %959 = vmatprep.subr.bf16.mxu0 0
        %960 = vmatpush1.bf16.msra.mxu0 0
        %961 = vmatprep.subr.bf16.mxu0 0
        %962 = vmatpush1.bf16.msra.mxu0 0
        %963 = vmatprep.subr.bf16.mxu0 0
        %964 = vmatpush1.bf16.msra.mxu0 0
        %965 = vmatprep.subr.bf16.mxu0 0
        %966 = vmatpush1.bf16.msra.mxu0 0
        %967 = vmatprep.subr.bf16.mxu0 0
        %968 = vmatpush1.bf16.msra.mxu0 0
        %969 = vmatprep.subr.bf16.mxu0 0
        %970 = vmatpush1.bf16.msra.mxu0 0
        %971 = vmatprep.subr.bf16.mxu0 0
        %972 = vmatpush1.bf16.msra.mxu0 0
        %973 = vmatprep.subr.bf16.mxu0 0
        %974 = vmatpush1.bf16.msra.mxu0 0
        %975 = vmatprep.subr.bf16.mxu0 0
        %976 = vmatpush1.bf16.msra.mxu0 0
        %977 = vmatprep.subr.bf16.mxu0 0
        %978 = vmatpush1.bf16.msra.mxu0 0
        %979 = vmatprep.subr.bf16.mxu0 0
        %980 = vmatpush1.bf16.msra.mxu0 0
        %981 = vmatprep.mubr.bf16.mxu0 0
        %982 = vmatmul.mubr.bf16.gmra.mrb[0].mxu0 %v531
        %v983 = vpop.f32.mrb[0].mxu0
        %v984 = vadd.f32 0.0, %v983
        %v985 = vpop.f32.mrb[0].mxu0
        %v986 = vpop.f32.mrb[0].mxu0
        %v987 = vadd.f32 0.0, %v986
        %v988 = vpop.f32.mrb[0].mxu0
        %989 = vdwg.mxu0
        %s990 = scalar_lea.vmem [#allocation11], 16
        %v991 = vld [vmem:[%s990] sm:$0xf]
        %v992 = vld [vmem:[%s990 + $0x4] sm:$0xf]
        %v993 = vld [vmem:[%s990 + $0x8] sm:$0xf]
        %v994 = vld [vmem:[%s990 + $0xc] sm:$0xf]
        %v999 = vunpack.c.l.b16 %v991
        %v1000 = vunpack.c.l.b16 %v992
        %v1001 = vunpack.c.l.b16 %v993
        %v1002 = vunpack.c.l.b16 %v994
        %v1003 = vpack.c.b16 %v1000, %v999
        %v1004 = vpack.c.b16 %v1002, %v1001
        %1007 = vmatprep.subr.bf16.mxu0 0
        %1008 = vmatpush1.bf16.msra.mxu0 %v1003
        %1009 = vmatprep.subr.bf16.mxu0 0
        %1010 = vmatpush1.bf16.msra.mxu0 %v1004
        %1011 = vmatprep.subr.bf16.mxu0 0
        %1012 = vmatpush1.bf16.msra.mxu0 0
        %1013 = vmatprep.subr.bf16.mxu0 0
        %1014 = vmatpush1.bf16.msra.mxu0 0
        %1015 = vmatprep.subr.bf16.mxu0 0
        %1016 = vmatpush1.bf16.msra.mxu0 0
        %1017 = vmatprep.subr.bf16.mxu0 0
        %1018 = vmatpush1.bf16.msra.mxu0 0
        %1019 = vmatprep.subr.bf16.mxu0 0
        %1020 = vmatpush1.bf16.msra.mxu0 0
        %1021 = vmatprep.subr.bf16.mxu0 0
        %1022 = vmatpush1.bf16.msra.mxu0 0
        %1023 = vmatprep.subr.bf16.mxu0 0
        %1024 = vmatpush1.bf16.msra.mxu0 0
        %1025 = vmatprep.subr.bf16.mxu0 0
        %1026 = vmatpush1.bf16.msra.mxu0 0
        %1027 = vmatprep.subr.bf16.mxu0 0
        %1028 = vmatpush1.bf16.msra.mxu0 0
        %1029 = vmatprep.subr.bf16.mxu0 0
        %1030 = vmatpush1.bf16.msra.mxu0 0
        %1031 = vmatprep.subr.bf16.mxu0 0
        %1032 = vmatpush1.bf16.msra.mxu0 0
        %1033 = vmatprep.subr.bf16.mxu0 0
        %1034 = vmatpush1.bf16.msra.mxu0 0
        %1035 = vmatprep.subr.bf16.mxu0 0
        %1036 = vmatpush1.bf16.msra.mxu0 0
        %1037 = vmatprep.subr.bf16.mxu0 0
        %1038 = vmatpush1.bf16.msra.mxu0 0
        %1039 = vmatprep.mubr.bf16.mxu0 0
        %1040 = vmatmul.mubr.bf16.gmra.mrb[0].mxu0 %v596
        %v1041 = vpop.f32.mrb[0].mxu0
        %v1042 = vadd.f32 0.0, %v1041
        %v1043 = vpop.f32.mrb[0].mxu0
        %v1044 = vpop.f32.mrb[0].mxu0
        %v1045 = vadd.f32 0.0, %v1044
        %v1046 = vpop.f32.mrb[0].mxu0
        %1047 = vdwg.mxu0
        %v1048 = vpack.c.bf16 %v929, %v926
        %v1050 = vunpack.c.l.b16 %v1048
        %v1051 = vunpack.c.h.b16 %v1048
        %v1052 = vpack.c.b16 %v1050, %v1050
        %v1053 = vpack.c.b16 %v1051, %v1051
        %v1054 = vpack.c.bf16 %v987, %v984
        %v1056 = vunpack.c.l.b16 %v1054
        %v1057 = vunpack.c.h.b16 %v1054
        %v1058 = vpack.c.b16 %v1056, %v1056
        %v1059 = vpack.c.b16 %v1057, %v1057
        %v1060 = vpack.c.bf16 %v1045, %v1042
        %v1062 = vunpack.c.l.b16 %v1060
        %v1063 = vunpack.c.h.b16 %v1060
        %v1064 = vpack.c.b16 %v1062, %v1062
        %v1065 = vpack.c.b16 %v1063, %v1063
        %v1067 = vsel %vm464, %v1052, 0
        %v1070 = vsel %vm464, %v1058, 0
        %1072 = vmatprep.subr.bf16.mxu0 0
        %1073 = vmatpush1.bf16.xpose.msra.mxu0 %v1070
        %1074 = vmatprep.subr.bf16.mxu0 0
        %1075 = vmatpush1.bf16.xpose.msra.mxu0 0
        %1076 = vmatprep.subr.bf16.mxu0 0
        %1077 = vmatpush1.bf16.xpose.msra.mxu0 0
        %1078 = vmatprep.subr.bf16.mxu0 0
        %1079 = vmatpush1.bf16.xpose.msra.mxu0 0
        %1080 = vmatprep.subr.bf16.mxu0 0
        %1081 = vmatpush1.bf16.xpose.msra.mxu0 0
        %1082 = vmatprep.subr.bf16.mxu0 0
        %1083 = vmatpush1.bf16.xpose.msra.mxu0 0
        %1084 = vmatprep.subr.bf16.mxu0 0
        %1085 = vmatpush1.bf16.xpose.msra.mxu0 0
        %1086 = vmatprep.subr.bf16.mxu0 0
        %1087 = vmatpush1.bf16.xpose.msra.mxu0 0
        %1088 = vmatprep.subr.bf16.mxu0 0
        %1089 = vmatpush1.bf16.xpose.msra.mxu0 0
        %1090 = vmatprep.subr.bf16.mxu0 0
        %1091 = vmatpush1.bf16.xpose.msra.mxu0 0
        %1092 = vmatprep.subr.bf16.mxu0 0
        %1093 = vmatpush1.bf16.xpose.msra.mxu0 0
        %1094 = vmatprep.subr.bf16.mxu0 0
        %1095 = vmatpush1.bf16.xpose.msra.mxu0 0
        %1096 = vmatprep.subr.bf16.mxu0 0
        %1097 = vmatpush1.bf16.xpose.msra.mxu0 0
        %1098 = vmatprep.subr.bf16.mxu0 0
        %1099 = vmatpush1.bf16.xpose.msra.mxu0 0
        %1100 = vmatprep.subr.bf16.mxu0 0
        %1101 = vmatpush1.bf16.xpose.msra.mxu0 0
        %1102 = vmatprep.subr.bf16.mxu0 0
        %1103 = vmatpush1.bf16.xpose.msra.mxu0 0
        %1104 = vmatprep.mubr.bf16.mxu0 0
        %1105 = vmatmul.mubr.bf16.gmra.mrb[0].mxu0 %v1067
        %v1106 = vpop.f32.mrb[0].mxu0
        %v1107 = vadd.f32 0.0, %v1106
        %v1108 = vpop.f32.mrb[0].mxu0
        %v1109 = vpop.f32.mrb[0].mxu0
        %v1110 = vpop.f32.mrb[0].mxu0
        %1111 = vdwg.mxu0
        %v1113 = vsel %vm464, %v1053, 0
        %v1116 = vsel %vm464, %v1059, 0
        %1118 = vmatprep.subr.bf16.mxu0 0
        %1119 = vmatpush1.bf16.xpose.msra.mxu0 %v1116
        %1120 = vmatprep.subr.bf16.mxu0 0
        %1121 = vmatpush1.bf16.xpose.msra.mxu0 0
        %1122 = vmatprep.subr.bf16.mxu0 0
        %1123 = vmatpush1.bf16.xpose.msra.mxu0 0
        %1124 = vmatprep.subr.bf16.mxu0 0
        %1125 = vmatpush1.bf16.xpose.msra.mxu0 0
        %1126 = vmatprep.subr.bf16.mxu0 0
        %1127 = vmatpush1.bf16.xpose.msra.mxu0 0
        %1128 = vmatprep.subr.bf16.mxu0 0
        %1129 = vmatpush1.bf16.xpose.msra.mxu0 0
        %1130 = vmatprep.subr.bf16.mxu0 0
        %1131 = vmatpush1.bf16.xpose.msra.mxu0 0
        %1132 = vmatprep.subr.bf16.mxu0 0
        %1133 = vmatpush1.bf16.xpose.msra.mxu0 0
        %1134 = vmatprep.subr.bf16.mxu0 0
        %1135 = vmatpush1.bf16.xpose.msra.mxu0 0
        %1136 = vmatprep.subr.bf16.mxu0 0
        %1137 = vmatpush1.bf16.xpose.msra.mxu0 0
        %1138 = vmatprep.subr.bf16.mxu0 0
        %1139 = vmatpush1.bf16.xpose.msra.mxu0 0
        %1140 = vmatprep.subr.bf16.mxu0 0
        %1141 = vmatpush1.bf16.xpose.msra.mxu0 0
        %1142 = vmatprep.subr.bf16.mxu0 0
        %1143 = vmatpush1.bf16.xpose.msra.mxu0 0
        %1144 = vmatprep.subr.bf16.mxu0 0
        %1145 = vmatpush1.bf16.xpose.msra.mxu0 0
        %1146 = vmatprep.subr.bf16.mxu0 0
        %1147 = vmatpush1.bf16.xpose.msra.mxu0 0
        %1148 = vmatprep.subr.bf16.mxu0 0
        %1149 = vmatpush1.bf16.xpose.msra.mxu0 0
        %1150 = vmatprep.mubr.bf16.mxu0 0
        %1151 = vmatmul.mubr.bf16.gmra.mrb[0].mxu0 %v1113
        %v1152 = vpop.f32.mrb[0].mxu0
        %v1153 = vadd.f32 0.0, %v1152
        %v1154 = vpop.f32.mrb[0].mxu0
        %v1155 = vpop.f32.mrb[0].mxu0
        %v1156 = vpop.f32.mrb[0].mxu0
        %1157 = vdwg.mxu0
        %v1158 = vmul.f32 %v1107, 0.17677669
        %v1159 = vmul.f32 %v1153, 0.17677669
        %v1160 = vsel %vm751, %v1158, -inf
        %1161 = vmax.xlane.f32.xlu0 %v1160
        %v1162 = vpop.xlane.xlu0 %1161
        %v1163 = vsel %vm751, %v1159, -inf
        %1164 = vmax.xlane.f32.xlu0 %v1163
        %v1165 = vpop.xlane.xlu0 %1164
        %v1166 = vsub.f32 %v1158, %v1162
        %v1167 = vsub.f32 %v1159, %v1165
        %v1168 = vmul.f32 %v1166, 1.442695
        %v1169 = vpow.pop %v1168
        %v1170 = vmul.f32 %v1167, 1.442695
        %v1171 = vpow.pop %v1170
        %v1172 = vsel %vm751, %v1169, 0.0
        %1173 = vadd.xlane.f32.xlu0 %v1172
        %v1174 = vpop.xlane.xlu0 %1173
        %v1175 = vsel %vm751, %v1171, 0.0
        %1176 = vadd.xlane.f32.xlu0 %v1175
        %v1177 = vpop.xlane.xlu0 %1176
        %v1178 = vrcp.pop %v1174
        %v1179 = vrcp.pop %v1177
        %v1180 = vmul.f32 %v1169, %v1178
        %v1181 = vmul.f32 %v1171, %v1179
        %v1182 = vpack.c.bf16 %v1180, %v1180
        %v1183 = vpack.c.bf16 %v1181, %v1181
        %v1185 = vsel %vm751, %v1182, 0
        %v1188 = vsel %vm779, %v1064, 0
        %1190 = vmatprep.subr.bf16.mxu0 0
        %1191 = vmatpush1.bf16.msra.mxu0 %v1188
        %1192 = vmatprep.subr.bf16.mxu0 0
        %1193 = vmatpush1.bf16.msra.mxu0 0
        %1194 = vmatprep.subr.bf16.mxu0 0
        %1195 = vmatpush1.bf16.msra.mxu0 0
        %1196 = vmatprep.subr.bf16.mxu0 0
        %1197 = vmatpush1.bf16.msra.mxu0 0
        %1198 = vmatprep.subr.bf16.mxu0 0
        %1199 = vmatpush1.bf16.msra.mxu0 0
        %1200 = vmatprep.subr.bf16.mxu0 0
        %1201 = vmatpush1.bf16.msra.mxu0 0
        %1202 = vmatprep.subr.bf16.mxu0 0
        %1203 = vmatpush1.bf16.msra.mxu0 0
        %1204 = vmatprep.subr.bf16.mxu0 0
        %1205 = vmatpush1.bf16.msra.mxu0 0
        %1206 = vmatprep.subr.bf16.mxu0 0
        %1207 = vmatpush1.bf16.msra.mxu0 0
        %1208 = vmatprep.subr.bf16.mxu0 0
        %1209 = vmatpush1.bf16.msra.mxu0 0
        %1210 = vmatprep.subr.bf16.mxu0 0
        %1211 = vmatpush1.bf16.msra.mxu0 0
        %1212 = vmatprep.subr.bf16.mxu0 0
        %1213 = vmatpush1.bf16.msra.mxu0 0
        %1214 = vmatprep.subr.bf16.mxu0 0
        %1215 = vmatpush1.bf16.msra.mxu0 0
        %1216 = vmatprep.subr.bf16.mxu0 0
        %1217 = vmatpush1.bf16.msra.mxu0 0
        %1218 = vmatprep.subr.bf16.mxu0 0
        %1219 = vmatpush1.bf16.msra.mxu0 0
        %1220 = vmatprep.subr.bf16.mxu0 0
        %1221 = vmatpush1.bf16.msra.mxu0 0
        %1222 = vmatprep.mubr.bf16.mxu0 0
        %1223 = vmatmul.mubr.bf16.gmra.mrb[0].mxu0 %v1185
        %v1224 = vpop.f32.mrb[0].mxu0
        %v1225 = vadd.f32 0.0, %v1224
        %v1226 = vpop.f32.mrb[0].mxu0
        %v1227 = vpop.f32.mrb[0].mxu0
        %v1228 = vpop.f32.mrb[0].mxu0
        %1229 = vdwg.mxu0
        %v1231 = vsel %vm751, %v1183, 0
        %v1234 = vsel %vm779, %v1065, 0
        %1236 = vmatprep.subr.bf16.mxu0 0
        %1237 = vmatpush1.bf16.msra.mxu0 %v1234
        %1238 = vmatprep.subr.bf16.mxu0 0
        %1239 = vmatpush1.bf16.msra.mxu0 0
        %1240 = vmatprep.subr.bf16.mxu0 0
        %1241 = vmatpush1.bf16.msra.mxu0 0
        %1242 = vmatprep.subr.bf16.mxu0 0
        %1243 = vmatpush1.bf16.msra.mxu0 0
        %1244 = vmatprep.subr.bf16.mxu0 0
        %1245 = vmatpush1.bf16.msra.mxu0 0
        %1246 = vmatprep.subr.bf16.mxu0 0
        %1247 = vmatpush1.bf16.msra.mxu0 0
        %1248 = vmatprep.subr.bf16.mxu0 0
        %1249 = vmatpush1.bf16.msra.mxu0 0
        %1250 = vmatprep.subr.bf16.mxu0 0
        %1251 = vmatpush1.bf16.msra.mxu0 0
        %1252 = vmatprep.subr.bf16.mxu0 0
        %1253 = vmatpush1.bf16.msra.mxu0 0
        %1254 = vmatprep.subr.bf16.mxu0 0
        %1255 = vmatpush1.bf16.msra.mxu0 0
        %1256 = vmatprep.subr.bf16.mxu0 0
        %1257 = vmatpush1.bf16.msra.mxu0 0
        %1258 = vmatprep.subr.bf16.mxu0 0
        %1259 = vmatpush1.bf16.msra.mxu0 0
        %1260 = vmatprep.subr.bf16.mxu0 0
        %1261 = vmatpush1.bf16.msra.mxu0 0
        %1262 = vmatprep.subr.bf16.mxu0 0
        %1263 = vmatpush1.bf16.msra.mxu0 0
        %1264 = vmatprep.subr.bf16.mxu0 0
        %1265 = vmatpush1.bf16.msra.mxu0 0
        %1266 = vmatprep.subr.bf16.mxu0 0
        %1267 = vmatpush1.bf16.msra.mxu0 0
        %1268 = vmatprep.mubr.bf16.mxu0 0
        %1269 = vmatmul.mubr.bf16.gmra.mrb[0].mxu0 %v1231
        %v1270 = vpop.f32.mrb[0].mxu0
        %v1271 = vadd.f32 0.0, %v1270
        %v1272 = vpop.f32.mrb[0].mxu0
        %v1273 = vpop.f32.mrb[0].mxu0
        %v1274 = vpop.f32.mrb[0].mxu0
        %1275 = vdwg.mxu0
        %v1276 = vpack.c.bf16 %v1271, %v1225
        %s1277 = scalar_lea.vmem [#allocation13], 16
        %v1278 = vld [vmem:[%s1277] sm:$0xf]
        %v1279 = vld [vmem:[%s1277 + $0x4] sm:$0xf]
        %v1280 = vld [vmem:[%s1277 + $0x8] sm:$0xf]
        %v1281 = vld [vmem:[%s1277 + $0xc] sm:$0xf]
        %v1286 = vunpack.c.l.b16 %v1278
        %v1287 = vunpack.c.l.b16 %v1279
        %v1288 = vunpack.c.l.b16 %v1280
        %v1289 = vunpack.c.l.b16 %v1281
        %v1290 = vpack.c.b16 %v1287, %v1286
        %v1291 = vpack.c.b16 %v1289, %v1288
        %v1295 = vsel %vm464, %v1276, 0
        %1297 = vmatprep.subr.bf16.mxu0 0
        %1298 = vmatpush1.bf16.msra.mxu0 %v1290
        %1299 = vmatprep.subr.bf16.mxu0 0
        %1300 = vmatpush1.bf16.msra.mxu0 %v1291
        %1301 = vmatprep.subr.bf16.mxu0 0
        %1302 = vmatpush1.bf16.msra.mxu0 0
        %1303 = vmatprep.subr.bf16.mxu0 0
        %1304 = vmatpush1.bf16.msra.mxu0 0
        %1305 = vmatprep.subr.bf16.mxu0 0
        %1306 = vmatpush1.bf16.msra.mxu0 0
        %1307 = vmatprep.subr.bf16.mxu0 0
        %1308 = vmatpush1.bf16.msra.mxu0 0
        %1309 = vmatprep.subr.bf16.mxu0 0
        %1310 = vmatpush1.bf16.msra.mxu0 0
        %1311 = vmatprep.subr.bf16.mxu0 0
        %1312 = vmatpush1.bf16.msra.mxu0 0
        %1313 = vmatprep.subr.bf16.mxu0 0
        %1314 = vmatpush1.bf16.msra.mxu0 0
        %1315 = vmatprep.subr.bf16.mxu0 0
        %1316 = vmatpush1.bf16.msra.mxu0 0
        %1317 = vmatprep.subr.bf16.mxu0 0
        %1318 = vmatpush1.bf16.msra.mxu0 0
        %1319 = vmatprep.subr.bf16.mxu0 0
        %1320 = vmatpush1.bf16.msra.mxu0 0
        %1321 = vmatprep.subr.bf16.mxu0 0
        %1322 = vmatpush1.bf16.msra.mxu0 0
        %1323 = vmatprep.subr.bf16.mxu0 0
        %1324 = vmatpush1.bf16.msra.mxu0 0
        %1325 = vmatprep.subr.bf16.mxu0 0
        %1326 = vmatpush1.bf16.msra.mxu0 0
        %1327 = vmatprep.subr.bf16.mxu0 0
        %1328 = vmatpush1.bf16.msra.mxu0 0
        %1329 = vmatprep.mubr.bf16.mxu0 0
        %1330 = vmatmul.mubr.bf16.gmra.mrb[0].mxu0 %v1295
        %v1331 = vpop.f32.mrb[0].mxu0
        %v1332 = vadd.f32 0.0, %v1331
        %v1333 = vpop.f32.mrb[0].mxu0
        %v1334 = vpop.f32.mrb[0].mxu0
        %v1335 = vadd.f32 0.0, %v1334
        %v1336 = vpop.f32.mrb[0].mxu0
        %1337 = vdwg.mxu0
        %v1342 = vunpack.c.l.b16 %v870
        %v1343 = vunpack.c.l.b16 %v871
        %v1344 = vunpack.c.l.b16 %v872
        %v1345 = vunpack.c.l.b16 %v873
        %v1346 = vpack.c.b16 %v1343, %v1342
        %v1347 = vpack.c.b16 %v1345, %v1344
        %v1351 = vsel %vm464, %v869, 0
        %1353 = vmatprep.subr.bf16.mxu0 0
        %1354 = vmatpush1.bf16.msra.mxu0 %v1346
        %1355 = vmatprep.subr.bf16.mxu0 0
        %1356 = vmatpush1.bf16.msra.mxu0 %v1347
        %1357 = vmatprep.subr.bf16.mxu0 0
        %1358 = vmatpush1.bf16.msra.mxu0 0
        %1359 = vmatprep.subr.bf16.mxu0 0
        %1360 = vmatpush1.bf16.msra.mxu0 0
        %1361 = vmatprep.subr.bf16.mxu0 0
        %1362 = vmatpush1.bf16.msra.mxu0 0
        %1363 = vmatprep.subr.bf16.mxu0 0
        %1364 = vmatpush1.bf16.msra.mxu0 0
        %1365 = vmatprep.subr.bf16.mxu0 0
        %1366 = vmatpush1.bf16.msra.mxu0 0
        %1367 = vmatprep.subr.bf16.mxu0 0
        %1368 = vmatpush1.bf16.msra.mxu0 0
        %1369 = vmatprep.subr.bf16.mxu0 0
        %1370 = vmatpush1.bf16.msra.mxu0 0
        %1371 = vmatprep.subr.bf16.mxu0 0
        %1372 = vmatpush1.bf16.msra.mxu0 0
        %1373 = vmatprep.subr.bf16.mxu0 0
        %1374 = vmatpush1.bf16.msra.mxu0 0
        %1375 = vmatprep.subr.bf16.mxu0 0
        %1376 = vmatpush1.bf16.msra.mxu0 0
        %1377 = vmatprep.subr.bf16.mxu0 0
        %1378 = vmatpush1.bf16.msra.mxu0 0
        %1379 = vmatprep.subr.bf16.mxu0 0
        %1380 = vmatpush1.bf16.msra.mxu0 0
        %1381 = vmatprep.subr.bf16.mxu0 0
        %1382 = vmatpush1.bf16.msra.mxu0 0
        %1383 = vmatprep.subr.bf16.mxu0 0
        %1384 = vmatpush1.bf16.msra.mxu0 0
        %1385 = vmatprep.mubr.bf16.mxu0 0
        %1386 = vmatmul.mubr.bf16.gmra.mrb[0].mxu0 %v1351
        %v1387 = vpop.f32.mrb[0].mxu0
        %v1388 = vadd.f32 %v1332, %v1387
        %v1389 = vpop.f32.mrb[0].mxu0
        %v1390 = vpop.f32.mrb[0].mxu0
        %v1391 = vadd.f32 %v1335, %v1390
        %v1392 = vpop.f32.mrb[0].mxu0
        %1393 = vdwg.mxu0
        %s1394 = scalar_lea.vmem [#allocation8], 32
        %v1395 = vld [vmem:[%s1394] sm:$0xf]
        %v1396 = vld [vmem:[%s1394 + $0x4] sm:$0xf]
        %v1397 = vld [vmem:[%s1394 + $0x8] sm:$0xf]
        %v1398 = vld [vmem:[%s1394 + $0xc] sm:$0xf]
        %v1403 = vunpack.c.l.b16 %v1395
        %v1404 = vunpack.c.l.b16 %v1396
        %v1405 = vunpack.c.l.b16 %v1397
        %v1406 = vunpack.c.l.b16 %v1398
        %v1407 = vpack.c.b16 %v1404, %v1403
        %v1408 = vpack.c.b16 %v1406, %v1405
        %1411 = vmatprep.subr.bf16.mxu0 0
        %1412 = vmatpush1.bf16.msra.mxu0 %v1407
        %1413 = vmatprep.subr.bf16.mxu0 0
        %1414 = vmatpush1.bf16.msra.mxu0 %v1408
        %1415 = vmatprep.subr.bf16.mxu0 0
        %1416 = vmatpush1.bf16.msra.mxu0 0
        %1417 = vmatprep.subr.bf16.mxu0 0
        %1418 = vmatpush1.bf16.msra.mxu0 0
        %1419 = vmatprep.subr.bf16.mxu0 0
        %1420 = vmatpush1.bf16.msra.mxu0 0
        %1421 = vmatprep.subr.bf16.mxu0 0
        %1422 = vmatpush1.bf16.msra.mxu0 0
        %1423 = vmatprep.subr.bf16.mxu0 0
        %1424 = vmatpush1.bf16.msra.mxu0 0
        %1425 = vmatprep.subr.bf16.mxu0 0
        %1426 = vmatpush1.bf16.msra.mxu0 0
        %1427 = vmatprep.subr.bf16.mxu0 0
        %1428 = vmatpush1.bf16.msra.mxu0 0
        %1429 = vmatprep.subr.bf16.mxu0 0
        %1430 = vmatpush1.bf16.msra.mxu0 0
        %1431 = vmatprep.subr.bf16.mxu0 0
        %1432 = vmatpush1.bf16.msra.mxu0 0
        %1433 = vmatprep.subr.bf16.mxu0 0
        %1434 = vmatpush1.bf16.msra.mxu0 0
        %1435 = vmatprep.subr.bf16.mxu0 0
        %1436 = vmatpush1.bf16.msra.mxu0 0
        %1437 = vmatprep.subr.bf16.mxu0 0
        %1438 = vmatpush1.bf16.msra.mxu0 0
        %1439 = vmatprep.subr.bf16.mxu0 0
        %1440 = vmatpush1.bf16.msra.mxu0 0
        %1441 = vmatprep.subr.bf16.mxu0 0
        %1442 = vmatpush1.bf16.msra.mxu0 0
        %1443 = vmatprep.mubr.bf16.mxu0 0
        %1444 = vmatmul.mubr.bf16.gmra.mrb[0].mxu0 %v466
        %v1445 = vpop.f32.mrb[0].mxu0
        %v1446 = vadd.f32 0.0, %v1445
        %v1447 = vpop.f32.mrb[0].mxu0
        %v1448 = vpop.f32.mrb[0].mxu0
        %v1449 = vadd.f32 0.0, %v1448
        %v1450 = vpop.f32.mrb[0].mxu0
        %1451 = vdwg.mxu0
        %s1452 = scalar_lea.vmem [#allocation10], 32
        %v1453 = vld [vmem:[%s1452] sm:$0xf]
        %v1454 = vld [vmem:[%s1452 + $0x4] sm:$0xf]
        %v1455 = vld [vmem:[%s1452 + $0x8] sm:$0xf]
        %v1456 = vld [vmem:[%s1452 + $0xc] sm:$0xf]
        %v1461 = vunpack.c.l.b16 %v1453
        %v1462 = vunpack.c.l.b16 %v1454
        %v1463 = vunpack.c.l.b16 %v1455
        %v1464 = vunpack.c.l.b16 %v1456
        %v1465 = vpack.c.b16 %v1462, %v1461
        %v1466 = vpack.c.b16 %v1464, %v1463
        %1469 = vmatprep.subr.bf16.mxu0 0
        %1470 = vmatpush1.bf16.msra.mxu0 %v1465
        %1471 = vmatprep.subr.bf16.mxu0 0
        %1472 = vmatpush1.bf16.msra.mxu0 %v1466
        %1473 = vmatprep.subr.bf16.mxu0 0
        %1474 = vmatpush1.bf16.msra.mxu0 0
        %1475 = vmatprep.subr.bf16.mxu0 0
        %1476 = vmatpush1.bf16.msra.mxu0 0
        %1477 = vmatprep.subr.bf16.mxu0 0
        %1478 = vmatpush1.bf16.msra.mxu0 0
        %1479 = vmatprep.subr.bf16.mxu0 0
        %1480 = vmatpush1.bf16.msra.mxu0 0
        %1481 = vmatprep.subr.bf16.mxu0 0
        %1482 = vmatpush1.bf16.msra.mxu0 0
        %1483 = vmatprep.subr.bf16.mxu0 0
        %1484 = vmatpush1.bf16.msra.mxu0 0
        %1485 = vmatprep.subr.bf16.mxu0 0
        %1486 = vmatpush1.bf16.msra.mxu0 0
        %1487 = vmatprep.subr.bf16.mxu0 0
        %1488 = vmatpush1.bf16.msra.mxu0 0
        %1489 = vmatprep.subr.bf16.mxu0 0
        %1490 = vmatpush1.bf16.msra.mxu0 0
        %1491 = vmatprep.subr.bf16.mxu0 0
        %1492 = vmatpush1.bf16.msra.mxu0 0
        %1493 = vmatprep.subr.bf16.mxu0 0
        %1494 = vmatpush1.bf16.msra.mxu0 0
        %1495 = vmatprep.subr.bf16.mxu0 0
        %1496 = vmatpush1.bf16.msra.mxu0 0
        %1497 = vmatprep.subr.bf16.mxu0 0
        %1498 = vmatpush1.bf16.msra.mxu0 0
        %1499 = vmatprep.subr.bf16.mxu0 0
        %1500 = vmatpush1.bf16.msra.mxu0 0
        %1501 = vmatprep.mubr.bf16.mxu0 0
        %1502 = vmatmul.mubr.bf16.gmra.mrb[0].mxu0 %v531
        %v1503 = vpop.f32.mrb[0].mxu0
        %v1504 = vadd.f32 0.0, %v1503
        %v1505 = vpop.f32.mrb[0].mxu0
        %v1506 = vpop.f32.mrb[0].mxu0
        %v1507 = vadd.f32 0.0, %v1506
        %v1508 = vpop.f32.mrb[0].mxu0
        %1509 = vdwg.mxu0
        %s1510 = scalar_lea.vmem [#allocation11], 32
        %v1511 = vld [vmem:[%s1510] sm:$0xf]
        %v1512 = vld [vmem:[%s1510 + $0x4] sm:$0xf]
        %v1513 = vld [vmem:[%s1510 + $0x8] sm:$0xf]
        %v1514 = vld [vmem:[%s1510 + $0xc] sm:$0xf]
        %v1519 = vunpack.c.l.b16 %v1511
        %v1520 = vunpack.c.l.b16 %v1512
        %v1521 = vunpack.c.l.b16 %v1513
        %v1522 = vunpack.c.l.b16 %v1514
        %v1523 = vpack.c.b16 %v1520, %v1519
        %v1524 = vpack.c.b16 %v1522, %v1521
        %1527 = vmatprep.subr.bf16.mxu0 0
        %1528 = vmatpush1.bf16.msra.mxu0 %v1523
        %1529 = vmatprep.subr.bf16.mxu0 0
        %1530 = vmatpush1.bf16.msra.mxu0 %v1524
        %1531 = vmatprep.subr.bf16.mxu0 0
        %1532 = vmatpush1.bf16.msra.mxu0 0
        %1533 = vmatprep.subr.bf16.mxu0 0
        %1534 = vmatpush1.bf16.msra.mxu0 0
        %1535 = vmatprep.subr.bf16.mxu0 0
        %1536 = vmatpush1.bf16.msra.mxu0 0
        %1537 = vmatprep.subr.bf16.mxu0 0
        %1538 = vmatpush1.bf16.msra.mxu0 0
        %1539 = vmatprep.subr.bf16.mxu0 0
        %1540 = vmatpush1.bf16.msra.mxu0 0
        %1541 = vmatprep.subr.bf16.mxu0 0
        %1542 = vmatpush1.bf16.msra.mxu0 0
        %1543 = vmatprep.subr.bf16.mxu0 0
        %1544 = vmatpush1.bf16.msra.mxu0 0
        %1545 = vmatprep.subr.bf16.mxu0 0
        %1546 = vmatpush1.bf16.msra.mxu0 0
        %1547 = vmatprep.subr.bf16.mxu0 0
        %1548 = vmatpush1.bf16.msra.mxu0 0
        %1549 = vmatprep.subr.bf16.mxu0 0
        %1550 = vmatpush1.bf16.msra.mxu0 0
        %1551 = vmatprep.subr.bf16.mxu0 0
        %1552 = vmatpush1.bf16.msra.mxu0 0
        %1553 = vmatprep.subr.bf16.mxu0 0
        %1554 = vmatpush1.bf16.msra.mxu0 0
        %1555 = vmatprep.subr.bf16.mxu0 0
        %1556 = vmatpush1.bf16.msra.mxu0 0
        %1557 = vmatprep.subr.bf16.mxu0 0
        %1558 = vmatpush1.bf16.msra.mxu0 0
        %1559 = vmatprep.mubr.bf16.mxu0 0
        %1560 = vmatmul.mubr.bf16.gmra.mrb[0].mxu0 %v596
        %v1561 = vpop.f32.mrb[0].mxu0
        %v1562 = vadd.f32 0.0, %v1561
        %v1563 = vpop.f32.mrb[0].mxu0
        %v1564 = vpop.f32.mrb[0].mxu0
        %v1565 = vadd.f32 0.0, %v1564
        %v1566 = vpop.f32.mrb[0].mxu0
        %1567 = vdwg.mxu0
        %v1568 = vpack.c.bf16 %v1449, %v1446
        %v1570 = vunpack.c.l.b16 %v1568
        %v1571 = vunpack.c.h.b16 %v1568
        %v1572 = vpack.c.b16 %v1570, %v1570
        %v1573 = vpack.c.b16 %v1571, %v1571
        %v1574 = vpack.c.bf16 %v1507, %v1504
        %v1576 = vunpack.c.l.b16 %v1574
        %v1577 = vunpack.c.h.b16 %v1574
        %v1578 = vpack.c.b16 %v1576, %v1576
        %v1579 = vpack.c.b16 %v1577, %v1577
        %v1580 = vpack.c.bf16 %v1565, %v1562
        %v1582 = vunpack.c.l.b16 %v1580
        %v1583 = vunpack.c.h.b16 %v1580
        %v1584 = vpack.c.b16 %v1582, %v1582
        %v1585 = vpack.c.b16 %v1583, %v1583
        %v1587 = vsel %vm464, %v1572, 0
        %v1590 = vsel %vm464, %v1578, 0
        %1592 = vmatprep.subr.bf16.mxu0 0
        %1593 = vmatpush1.bf16.xpose.msra.mxu0 %v1590
        %1594 = vmatprep.subr.bf16.mxu0 0
        %1595 = vmatpush1.bf16.xpose.msra.mxu0 0
        %1596 = vmatprep.subr.bf16.mxu0 0
        %1597 = vmatpush1.bf16.xpose.msra.mxu0 0
        %1598 = vmatprep.subr.bf16.mxu0 0
        %1599 = vmatpush1.bf16.xpose.msra.mxu0 0
        %1600 = vmatprep.subr.bf16.mxu0 0
        %1601 = vmatpush1.bf16.xpose.msra.mxu0 0
        %1602 = vmatprep.subr.bf16.mxu0 0
        %1603 = vmatpush1.bf16.xpose.msra.mxu0 0
        %1604 = vmatprep.subr.bf16.mxu0 0
        %1605 = vmatpush1.bf16.xpose.msra.mxu0 0
        %1606 = vmatprep.subr.bf16.mxu0 0
        %1607 = vmatpush1.bf16.xpose.msra.mxu0 0
        %1608 = vmatprep.subr.bf16.mxu0 0
        %1609 = vmatpush1.bf16.xpose.msra.mxu0 0
        %1610 = vmatprep.subr.bf16.mxu0 0
        %1611 = vmatpush1.bf16.xpose.msra.mxu0 0
        %1612 = vmatprep.subr.bf16.mxu0 0
        %1613 = vmatpush1.bf16.xpose.msra.mxu0 0
        %1614 = vmatprep.subr.bf16.mxu0 0
        %1615 = vmatpush1.bf16.xpose.msra.mxu0 0
        %1616 = vmatprep.subr.bf16.mxu0 0
        %1617 = vmatpush1.bf16.xpose.msra.mxu0 0
        %1618 = vmatprep.subr.bf16.mxu0 0
        %1619 = vmatpush1.bf16.xpose.msra.mxu0 0
        %1620 = vmatprep.subr.bf16.mxu0 0
        %1621 = vmatpush1.bf16.xpose.msra.mxu0 0
        %1622 = vmatprep.subr.bf16.mxu0 0
        %1623 = vmatpush1.bf16.xpose.msra.mxu0 0
        %1624 = vmatprep.mubr.bf16.mxu0 0
        %1625 = vmatmul.mubr.bf16.gmra.mrb[0].mxu0 %v1587
        %v1626 = vpop.f32.mrb[0].mxu0
        %v1627 = vadd.f32 0.0, %v1626
        %v1628 = vpop.f32.mrb[0].mxu0
        %v1629 = vpop.f32.mrb[0].mxu0
        %v1630 = vpop.f32.mrb[0].mxu0
        %1631 = vdwg.mxu0
        %v1633 = vsel %vm464, %v1573, 0
        %v1636 = vsel %vm464, %v1579, 0
        %1638 = vmatprep.subr.bf16.mxu0 0
        %1639 = vmatpush1.bf16.xpose.msra.mxu0 %v1636
        %1640 = vmatprep.subr.bf16.mxu0 0
        %1641 = vmatpush1.bf16.xpose.msra.mxu0 0
        %1642 = vmatprep.subr.bf16.mxu0 0
        %1643 = vmatpush1.bf16.xpose.msra.mxu0 0
        %1644 = vmatprep.subr.bf16.mxu0 0
        %1645 = vmatpush1.bf16.xpose.msra.mxu0 0
        %1646 = vmatprep.subr.bf16.mxu0 0
        %1647 = vmatpush1.bf16.xpose.msra.mxu0 0
        %1648 = vmatprep.subr.bf16.mxu0 0
        %1649 = vmatpush1.bf16.xpose.msra.mxu0 0
        %1650 = vmatprep.subr.bf16.mxu0 0
        %1651 = vmatpush1.bf16.xpose.msra.mxu0 0
        %1652 = vmatprep.subr.bf16.mxu0 0
        %1653 = vmatpush1.bf16.xpose.msra.mxu0 0
        %1654 = vmatprep.subr.bf16.mxu0 0
        %1655 = vmatpush1.bf16.xpose.msra.mxu0 0
        %1656 = vmatprep.subr.bf16.mxu0 0
        %1657 = vmatpush1.bf16.xpose.msra.mxu0 0
        %1658 = vmatprep.subr.bf16.mxu0 0
        %1659 = vmatpush1.bf16.xpose.msra.mxu0 0
        %1660 = vmatprep.subr.bf16.mxu0 0
        %1661 = vmatpush1.bf16.xpose.msra.mxu0 0
        %1662 = vmatprep.subr.bf16.mxu0 0
        %1663 = vmatpush1.bf16.xpose.msra.mxu0 0
        %1664 = vmatprep.subr.bf16.mxu0 0
        %1665 = vmatpush1.bf16.xpose.msra.mxu0 0
        %1666 = vmatprep.subr.bf16.mxu0 0
        %1667 = vmatpush1.bf16.xpose.msra.mxu0 0
        %1668 = vmatprep.subr.bf16.mxu0 0
        %1669 = vmatpush1.bf16.xpose.msra.mxu0 0
        %1670 = vmatprep.mubr.bf16.mxu0 0
        %1671 = vmatmul.mubr.bf16.gmra.mrb[0].mxu0 %v1633
        %v1672 = vpop.f32.mrb[0].mxu0
        %v1673 = vadd.f32 0.0, %v1672
        %v1674 = vpop.f32.mrb[0].mxu0
        %v1675 = vpop.f32.mrb[0].mxu0
        %v1676 = vpop.f32.mrb[0].mxu0
        %1677 = vdwg.mxu0
        %v1678 = vmul.f32 %v1627, 0.17677669
        %v1679 = vmul.f32 %v1673, 0.17677669
        %v1680 = vsel %vm751, %v1678, -inf
        %1681 = vmax.xlane.f32.xlu0 %v1680
        %v1682 = vpop.xlane.xlu0 %1681
        %v1683 = vsel %vm751, %v1679, -inf
        %1684 = vmax.xlane.f32.xlu0 %v1683
        %v1685 = vpop.xlane.xlu0 %1684
        %v1686 = vsub.f32 %v1678, %v1682
        %v1687 = vsub.f32 %v1679, %v1685
        %v1688 = vmul.f32 %v1686, 1.442695
        %v1689 = vpow.pop %v1688
        %v1690 = vmul.f32 %v1687, 1.442695
        %v1691 = vpow.pop %v1690
        %v1692 = vsel %vm751, %v1689, 0.0
        %1693 = vadd.xlane.f32.xlu0 %v1692
        %v1694 = vpop.xlane.xlu0 %1693
        %v1695 = vsel %vm751, %v1691, 0.0
        %1696 = vadd.xlane.f32.xlu0 %v1695
        %v1697 = vpop.xlane.xlu0 %1696
        %v1698 = vrcp.pop %v1694
        %v1699 = vrcp.pop %v1697
        %v1700 = vmul.f32 %v1689, %v1698
        %v1701 = vmul.f32 %v1691, %v1699
        %v1702 = vpack.c.bf16 %v1700, %v1700
        %v1703 = vpack.c.bf16 %v1701, %v1701
        %v1705 = vsel %vm751, %v1702, 0
        %v1708 = vsel %vm779, %v1584, 0
        %1710 = vmatprep.subr.bf16.mxu0 0
        %1711 = vmatpush1.bf16.msra.mxu0 %v1708
        %1712 = vmatprep.subr.bf16.mxu0 0
        %1713 = vmatpush1.bf16.msra.mxu0 0
        %1714 = vmatprep.subr.bf16.mxu0 0
        %1715 = vmatpush1.bf16.msra.mxu0 0
        %1716 = vmatprep.subr.bf16.mxu0 0
        %1717 = vmatpush1.bf16.msra.mxu0 0
        %1718 = vmatprep.subr.bf16.mxu0 0
        %1719 = vmatpush1.bf16.msra.mxu0 0
        %1720 = vmatprep.subr.bf16.mxu0 0
        %1721 = vmatpush1.bf16.msra.mxu0 0
        %1722 = vmatprep.subr.bf16.mxu0 0
        %1723 = vmatpush1.bf16.msra.mxu0 0
        %1724 = vmatprep.subr.bf16.mxu0 0
        %1725 = vmatpush1.bf16.msra.mxu0 0
        %1726 = vmatprep.subr.bf16.mxu0 0
        %1727 = vmatpush1.bf16.msra.mxu0 0
        %1728 = vmatprep.subr.bf16.mxu0 0
        %1729 = vmatpush1.bf16.msra.mxu0 0
        %1730 = vmatprep.subr.bf16.mxu0 0
        %1731 = vmatpush1.bf16.msra.mxu0 0
        %1732 = vmatprep.subr.bf16.mxu0 0
        %1733 = vmatpush1.bf16.msra.mxu0 0
        %1734 = vmatprep.subr.bf16.mxu0 0
        %1735 = vmatpush1.bf16.msra.mxu0 0
        %1736 = vmatprep.subr.bf16.mxu0 0
        %1737 = vmatpush1.bf16.msra.mxu0 0
        %1738 = vmatprep.subr.bf16.mxu0 0
        %1739 = vmatpush1.bf16.msra.mxu0 0
        %1740 = vmatprep.subr.bf16.mxu0 0
        %1741 = vmatpush1.bf16.msra.mxu0 0
        %1742 = vmatprep.mubr.bf16.mxu0 0
        %1743 = vmatmul.mubr.bf16.gmra.mrb[0].mxu0 %v1705
        %v1744 = vpop.f32.mrb[0].mxu0
        %v1745 = vadd.f32 0.0, %v1744
        %v1746 = vpop.f32.mrb[0].mxu0
        %v1747 = vpop.f32.mrb[0].mxu0
        %v1748 = vpop.f32.mrb[0].mxu0
        %1749 = vdwg.mxu0
        %v1751 = vsel %vm751, %v1703, 0
        %v1754 = vsel %vm779, %v1585, 0
        %1756 = vmatprep.subr.bf16.mxu0 0
        %1757 = vmatpush1.bf16.msra.mxu0 %v1754
        %1758 = vmatprep.subr.bf16.mxu0 0
        %1759 = vmatpush1.bf16.msra.mxu0 0
        %1760 = vmatprep.subr.bf16.mxu0 0
        %1761 = vmatpush1.bf16.msra.mxu0 0
        %1762 = vmatprep.subr.bf16.mxu0 0
        %1763 = vmatpush1.bf16.msra.mxu0 0
        %1764 = vmatprep.subr.bf16.mxu0 0
        %1765 = vmatpush1.bf16.msra.mxu0 0
        %1766 = vmatprep.subr.bf16.mxu0 0
        %1767 = vmatpush1.bf16.msra.mxu0 0
        %1768 = vmatprep.subr.bf16.mxu0 0
        %1769 = vmatpush1.bf16.msra.mxu0 0
        %1770 = vmatprep.subr.bf16.mxu0 0
        %1771 = vmatpush1.bf16.msra.mxu0 0
        %1772 = vmatprep.subr.bf16.mxu0 0
        %1773 = vmatpush1.bf16.msra.mxu0 0
        %1774 = vmatprep.subr.bf16.mxu0 0
        %1775 = vmatpush1.bf16.msra.mxu0 0
        %1776 = vmatprep.subr.bf16.mxu0 0
        %1777 = vmatpush1.bf16.msra.mxu0 0
        %1778 = vmatprep.subr.bf16.mxu0 0
        %1779 = vmatpush1.bf16.msra.mxu0 0
        %1780 = vmatprep.subr.bf16.mxu0 0
        %1781 = vmatpush1.bf16.msra.mxu0 0
        %1782 = vmatprep.subr.bf16.mxu0 0
        %1783 = vmatpush1.bf16.msra.mxu0 0
        %1784 = vmatprep.subr.bf16.mxu0 0
        %1785 = vmatpush1.bf16.msra.mxu0 0
        %1786 = vmatprep.subr.bf16.mxu0 0
        %1787 = vmatpush1.bf16.msra.mxu0 0
        %1788 = vmatprep.mubr.bf16.mxu0 0
        %1789 = vmatmul.mubr.bf16.gmra.mrb[0].mxu0 %v1751
        %v1790 = vpop.f32.mrb[0].mxu0
        %v1791 = vadd.f32 0.0, %v1790
        %v1792 = vpop.f32.mrb[0].mxu0
        %v1793 = vpop.f32.mrb[0].mxu0
        %v1794 = vpop.f32.mrb[0].mxu0
        %1795 = vdwg.mxu0
        %v1796 = vpack.c.bf16 %v1791, %v1745
        %s1797 = scalar_lea.vmem [#allocation13], 32
        %v1798 = vld [vmem:[%s1797] sm:$0xf]
        %v1799 = vld [vmem:[%s1797 + $0x4] sm:$0xf]
        %v1800 = vld [vmem:[%s1797 + $0x8] sm:$0xf]
        %v1801 = vld [vmem:[%s1797 + $0xc] sm:$0xf]
        %v1806 = vunpack.c.l.b16 %v1798
        %v1807 = vunpack.c.l.b16 %v1799
        %v1808 = vunpack.c.l.b16 %v1800
        %v1809 = vunpack.c.l.b16 %v1801
        %v1810 = vpack.c.b16 %v1807, %v1806
        %v1811 = vpack.c.b16 %v1809, %v1808
        %v1815 = vsel %vm464, %v1796, 0
        %1817 = vmatprep.subr.bf16.mxu0 0
        %1818 = vmatpush1.bf16.msra.mxu0 %v1810
        %1819 = vmatprep.subr.bf16.mxu0 0
        %1820 = vmatpush1.bf16.msra.mxu0 %v1811
        %1821 = vmatprep.subr.bf16.mxu0 0
        %1822 = vmatpush1.bf16.msra.mxu0 0
        %1823 = vmatprep.subr.bf16.mxu0 0
        %1824 = vmatpush1.bf16.msra.mxu0 0
        %1825 = vmatprep.subr.bf16.mxu0 0
        %1826 = vmatpush1.bf16.msra.mxu0 0
        %1827 = vmatprep.subr.bf16.mxu0 0
        %1828 = vmatpush1.bf16.msra.mxu0 0
        %1829 = vmatprep.subr.bf16.mxu0 0
        %1830 = vmatpush1.bf16.msra.mxu0 0
        %1831 = vmatprep.subr.bf16.mxu0 0
        %1832 = vmatpush1.bf16.msra.mxu0 0
        %1833 = vmatprep.subr.bf16.mxu0 0
        %1834 = vmatpush1.bf16.msra.mxu0 0
        %1835 = vmatprep.subr.bf16.mxu0 0
        %1836 = vmatpush1.bf16.msra.mxu0 0
        %1837 = vmatprep.subr.bf16.mxu0 0
        %1838 = vmatpush1.bf16.msra.mxu0 0
        %1839 = vmatprep.subr.bf16.mxu0 0
        %1840 = vmatpush1.bf16.msra.mxu0 0
        %1841 = vmatprep.subr.bf16.mxu0 0
        %1842 = vmatpush1.bf16.msra.mxu0 0
        %1843 = vmatprep.subr.bf16.mxu0 0
        %1844 = vmatpush1.bf16.msra.mxu0 0
        %1845 = vmatprep.subr.bf16.mxu0 0
        %1846 = vmatpush1.bf16.msra.mxu0 0
        %1847 = vmatprep.subr.bf16.mxu0 0
        %1848 = vmatpush1.bf16.msra.mxu0 0
        %1849 = vmatprep.mubr.bf16.mxu0 0
        %1850 = vmatmul.mubr.bf16.gmra.mrb[0].mxu0 %v1815
        %v1851 = vpop.f32.mrb[0].mxu0
        %v1852 = vadd.f32 0.0, %v1851
        %v1853 = vpop.f32.mrb[0].mxu0
        %v1854 = vpop.f32.mrb[0].mxu0
        %v1855 = vadd.f32 0.0, %v1854
        %v1856 = vpop.f32.mrb[0].mxu0
        %1857 = vdwg.mxu0
        %v1858 = vadd.f32 %v1388, %v1852
        %v1859 = vadd.f32 %v1391, %v1855
        %s1860 = scalar_lea.vmem [#allocation8], 48
        %v1861 = vld [vmem:[%s1860] sm:$0xf]
        %v1862 = vld [vmem:[%s1860 + $0x4] sm:$0xf]
        %v1863 = vld [vmem:[%s1860 + $0x8] sm:$0xf]
        %v1864 = vld [vmem:[%s1860 + $0xc] sm:$0xf]
        %v1869 = vunpack.c.l.b16 %v1861
        %v1870 = vunpack.c.l.b16 %v1862
        %v1871 = vunpack.c.l.b16 %v1863
        %v1872 = vunpack.c.l.b16 %v1864
        %v1873 = vpack.c.b16 %v1870, %v1869
        %v1874 = vpack.c.b16 %v1872, %v1871
        %1877 = vmatprep.subr.bf16.mxu0 0
        %1878 = vmatpush1.bf16.msra.mxu0 %v1873
        %1879 = vmatprep.subr.bf16.mxu0 0
        %1880 = vmatpush1.bf16.msra.mxu0 %v1874
        %1881 = vmatprep.subr.bf16.mxu0 0
        %1882 = vmatpush1.bf16.msra.mxu0 0
        %1883 = vmatprep.subr.bf16.mxu0 0
        %1884 = vmatpush1.bf16.msra.mxu0 0
        %1885 = vmatprep.subr.bf16.mxu0 0
        %1886 = vmatpush1.bf16.msra.mxu0 0
        %1887 = vmatprep.subr.bf16.mxu0 0
        %1888 = vmatpush1.bf16.msra.mxu0 0
        %1889 = vmatprep.subr.bf16.mxu0 0
        %1890 = vmatpush1.bf16.msra.mxu0 0
        %1891 = vmatprep.subr.bf16.mxu0 0
        %1892 = vmatpush1.bf16.msra.mxu0 0
        %1893 = vmatprep.subr.bf16.mxu0 0
        %1894 = vmatpush1.bf16.msra.mxu0 0
        %1895 = vmatprep.subr.bf16.mxu0 0
        %1896 = vmatpush1.bf16.msra.mxu0 0
        %1897 = vmatprep.subr.bf16.mxu0 0
        %1898 = vmatpush1.bf16.msra.mxu0 0
        %1899 = vmatprep.subr.bf16.mxu0 0
        %1900 = vmatpush1.bf16.msra.mxu0 0
        %1901 = vmatprep.subr.bf16.mxu0 0
        %1902 = vmatpush1.bf16.msra.mxu0 0
        %1903 = vmatprep.subr.bf16.mxu0 0
        %1904 = vmatpush1.bf16.msra.mxu0 0
        %1905 = vmatprep.subr.bf16.mxu0 0
        %1906 = vmatpush1.bf16.msra.mxu0 0
        %1907 = vmatprep.subr.bf16.mxu0 0
        %1908 = vmatpush1.bf16.msra.mxu0 0
        %1909 = vmatprep.mubr.bf16.mxu0 0
        %1910 = vmatmul.mubr.bf16.gmra.mrb[0].mxu0 %v466
        %v1911 = vpop.f32.mrb[0].mxu0
        %v1912 = vadd.f32 0.0, %v1911
        %v1913 = vpop.f32.mrb[0].mxu0
        %v1914 = vpop.f32.mrb[0].mxu0
        %v1915 = vadd.f32 0.0, %v1914
        %v1916 = vpop.f32.mrb[0].mxu0
        %1917 = vdwg.mxu0
        %s1918 = scalar_lea.vmem [#allocation10], 48
        %v1919 = vld [vmem:[%s1918] sm:$0xf]
        %v1920 = vld [vmem:[%s1918 + $0x4] sm:$0xf]
        %v1921 = vld [vmem:[%s1918 + $0x8] sm:$0xf]
        %v1922 = vld [vmem:[%s1918 + $0xc] sm:$0xf]
        %v1927 = vunpack.c.l.b16 %v1919
        %v1928 = vunpack.c.l.b16 %v1920
        %v1929 = vunpack.c.l.b16 %v1921
        %v1930 = vunpack.c.l.b16 %v1922
        %v1931 = vpack.c.b16 %v1928, %v1927
        %v1932 = vpack.c.b16 %v1930, %v1929
        %1935 = vmatprep.subr.bf16.mxu0 0
        %1936 = vmatpush1.bf16.msra.mxu0 %v1931
        %1937 = vmatprep.subr.bf16.mxu0 0
        %1938 = vmatpush1.bf16.msra.mxu0 %v1932
        %1939 = vmatprep.subr.bf16.mxu0 0
        %1940 = vmatpush1.bf16.msra.mxu0 0
        %1941 = vmatprep.subr.bf16.mxu0 0
        %1942 = vmatpush1.bf16.msra.mxu0 0
        %1943 = vmatprep.subr.bf16.mxu0 0
        %1944 = vmatpush1.bf16.msra.mxu0 0
        %1945 = vmatprep.subr.bf16.mxu0 0
        %1946 = vmatpush1.bf16.msra.mxu0 0
        %1947 = vmatprep.subr.bf16.mxu0 0
        %1948 = vmatpush1.bf16.msra.mxu0 0
        %1949 = vmatprep.subr.bf16.mxu0 0
        %1950 = vmatpush1.bf16.msra.mxu0 0
        %1951 = vmatprep.subr.bf16.mxu0 0
        %1952 = vmatpush1.bf16.msra.mxu0 0
        %1953 = vmatprep.subr.bf16.mxu0 0
        %1954 = vmatpush1.bf16.msra.mxu0 0
        %1955 = vmatprep.subr.bf16.mxu0 0
        %1956 = vmatpush1.bf16.msra.mxu0 0
        %1957 = vmatprep.subr.bf16.mxu0 0
        %1958 = vmatpush1.bf16.msra.mxu0 0
        %1959 = vmatprep.subr.bf16.mxu0 0
        %1960 = vmatpush1.bf16.msra.mxu0 0
        %1961 = vmatprep.subr.bf16.mxu0 0
        %1962 = vmatpush1.bf16.msra.mxu0 0
        %1963 = vmatprep.subr.bf16.mxu0 0
        %1964 = vmatpush1.bf16.msra.mxu0 0
        %1965 = vmatprep.subr.bf16.mxu0 0
        %1966 = vmatpush1.bf16.msra.mxu0 0
        %1967 = vmatprep.mubr.bf16.mxu0 0
        %1968 = vmatmul.mubr.bf16.gmra.mrb[0].mxu0 %v531
        %v1969 = vpop.f32.mrb[0].mxu0
        %v1970 = vadd.f32 0.0, %v1969
        %v1971 = vpop.f32.mrb[0].mxu0
        %v1972 = vpop.f32.mrb[0].mxu0
        %v1973 = vadd.f32 0.0, %v1972
        %v1974 = vpop.f32.mrb[0].mxu0
        %1975 = vdwg.mxu0
        %s1976 = scalar_lea.vmem [#allocation11], 48
        %v1977 = vld [vmem:[%s1976] sm:$0xf]
        %v1978 = vld [vmem:[%s1976 + $0x4] sm:$0xf]
        %v1979 = vld [vmem:[%s1976 + $0x8] sm:$0xf]
        %v1980 = vld [vmem:[%s1976 + $0xc] sm:$0xf]
        %v1985 = vunpack.c.l.b16 %v1977
        %v1986 = vunpack.c.l.b16 %v1978
        %v1987 = vunpack.c.l.b16 %v1979
        %v1988 = vunpack.c.l.b16 %v1980
        %v1989 = vpack.c.b16 %v1986, %v1985
        %v1990 = vpack.c.b16 %v1988, %v1987
        %1993 = vmatprep.subr.bf16.mxu0 0
        %1994 = vmatpush1.bf16.msra.mxu0 %v1989
        %1995 = vmatprep.subr.bf16.mxu0 0
        %1996 = vmatpush1.bf16.msra.mxu0 %v1990
        %1997 = vmatprep.subr.bf16.mxu0 0
        %1998 = vmatpush1.bf16.msra.mxu0 0
        %1999 = vmatprep.subr.bf16.mxu0 0
        %2000 = vmatpush1.bf16.msra.mxu0 0
        %2001 = vmatprep.subr.bf16.mxu0 0
        %2002 = vmatpush1.bf16.msra.mxu0 0
        %2003 = vmatprep.subr.bf16.mxu0 0
        %2004 = vmatpush1.bf16.msra.mxu0 0
        %2005 = vmatprep.subr.bf16.mxu0 0
        %2006 = vmatpush1.bf16.msra.mxu0 0
        %2007 = vmatprep.subr.bf16.mxu0 0
        %2008 = vmatpush1.bf16.msra.mxu0 0
        %2009 = vmatprep.subr.bf16.mxu0 0
        %2010 = vmatpush1.bf16.msra.mxu0 0
        %2011 = vmatprep.subr.bf16.mxu0 0
        %2012 = vmatpush1.bf16.msra.mxu0 0
        %2013 = vmatprep.subr.bf16.mxu0 0
        %2014 = vmatpush1.bf16.msra.mxu0 0
        %2015 = vmatprep.subr.bf16.mxu0 0
        %2016 = vmatpush1.bf16.msra.mxu0 0
        %2017 = vmatprep.subr.bf16.mxu0 0
        %2018 = vmatpush1.bf16.msra.mxu0 0
        %2019 = vmatprep.subr.bf16.mxu0 0
        %2020 = vmatpush1.bf16.msra.mxu0 0
        %2021 = vmatprep.subr.bf16.mxu0 0
        %2022 = vmatpush1.bf16.msra.mxu0 0
        %2023 = vmatprep.subr.bf16.mxu0 0
        %2024 = vmatpush1.bf16.msra.mxu0 0
        %2025 = vmatprep.mubr.bf16.mxu0 0
        %2026 = vmatmul.mubr.bf16.gmra.mrb[0].mxu0 %v596
        %v2027 = vpop.f32.mrb[0].mxu0
        %v2028 = vadd.f32 0.0, %v2027
        %v2029 = vpop.f32.mrb[0].mxu0
        %v2030 = vpop.f32.mrb[0].mxu0
        %v2031 = vadd.f32 0.0, %v2030
        %v2032 = vpop.f32.mrb[0].mxu0
        %2033 = vdwg.mxu0
        %v2034 = vpack.c.bf16 %v1915, %v1912
        %v2036 = vunpack.c.l.b16 %v2034
        %v2037 = vunpack.c.h.b16 %v2034
        %v2038 = vpack.c.b16 %v2036, %v2036
        %v2039 = vpack.c.b16 %v2037, %v2037
        %v2040 = vpack.c.bf16 %v1973, %v1970
        %v2042 = vunpack.c.l.b16 %v2040
        %v2043 = vunpack.c.h.b16 %v2040
        %v2044 = vpack.c.b16 %v2042, %v2042
        %v2045 = vpack.c.b16 %v2043, %v2043
        %v2046 = vpack.c.bf16 %v2031, %v2028
        %v2048 = vunpack.c.l.b16 %v2046
        %v2049 = vunpack.c.h.b16 %v2046
        %v2050 = vpack.c.b16 %v2048, %v2048
        %v2051 = vpack.c.b16 %v2049, %v2049
        %v2053 = vsel %vm464, %v2038, 0
        %v2056 = vsel %vm464, %v2044, 0
        %2058 = vmatprep.subr.bf16.mxu0 0
        %2059 = vmatpush1.bf16.xpose.msra.mxu0 %v2056
        %2060 = vmatprep.subr.bf16.mxu0 0
        %2061 = vmatpush1.bf16.xpose.msra.mxu0 0
        %2062 = vmatprep.subr.bf16.mxu0 0
        %2063 = vmatpush1.bf16.xpose.msra.mxu0 0
        %2064 = vmatprep.subr.bf16.mxu0 0
        %2065 = vmatpush1.bf16.xpose.msra.mxu0 0
        %2066 = vmatprep.subr.bf16.mxu0 0
        %2067 = vmatpush1.bf16.xpose.msra.mxu0 0
        %2068 = vmatprep.subr.bf16.mxu0 0
        %2069 = vmatpush1.bf16.xpose.msra.mxu0 0
        %2070 = vmatprep.subr.bf16.mxu0 0
        %2071 = vmatpush1.bf16.xpose.msra.mxu0 0
        %2072 = vmatprep.subr.bf16.mxu0 0
        %2073 = vmatpush1.bf16.xpose.msra.mxu0 0
        %2074 = vmatprep.subr.bf16.mxu0 0
        %2075 = vmatpush1.bf16.xpose.msra.mxu0 0
        %2076 = vmatprep.subr.bf16.mxu0 0
        %2077 = vmatpush1.bf16.xpose.msra.mxu0 0
        %2078 = vmatprep.subr.bf16.mxu0 0
        %2079 = vmatpush1.bf16.xpose.msra.mxu0 0
        %2080 = vmatprep.subr.bf16.mxu0 0
        %2081 = vmatpush1.bf16.xpose.msra.mxu0 0
        %2082 = vmatprep.subr.bf16.mxu0 0
        %2083 = vmatpush1.bf16.xpose.msra.mxu0 0
        %2084 = vmatprep.subr.bf16.mxu0 0
        %2085 = vmatpush1.bf16.xpose.msra.mxu0 0
        %2086 = vmatprep.subr.bf16.mxu0 0
        %2087 = vmatpush1.bf16.xpose.msra.mxu0 0
        %2088 = vmatprep.subr.bf16.mxu0 0
        %2089 = vmatpush1.bf16.xpose.msra.mxu0 0
        %2090 = vmatprep.mubr.bf16.mxu0 0
        %2091 = vmatmul.mubr.bf16.gmra.mrb[0].mxu0 %v2053
        %v2092 = vpop.f32.mrb[0].mxu0
        %v2093 = vadd.f32 0.0, %v2092
        %v2094 = vpop.f32.mrb[0].mxu0
        %v2095 = vpop.f32.mrb[0].mxu0
        %v2096 = vpop.f32.mrb[0].mxu0
        %2097 = vdwg.mxu0
        %v2099 = vsel %vm464, %v2039, 0
        %v2102 = vsel %vm464, %v2045, 0
        %2104 = vmatprep.subr.bf16.mxu0 0
        %2105 = vmatpush1.bf16.xpose.msra.mxu0 %v2102
        %2106 = vmatprep.subr.bf16.mxu0 0
        %2107 = vmatpush1.bf16.xpose.msra.mxu0 0
        %2108 = vmatprep.subr.bf16.mxu0 0
        %2109 = vmatpush1.bf16.xpose.msra.mxu0 0
        %2110 = vmatprep.subr.bf16.mxu0 0
        %2111 = vmatpush1.bf16.xpose.msra.mxu0 0
        %2112 = vmatprep.subr.bf16.mxu0 0
        %2113 = vmatpush1.bf16.xpose.msra.mxu0 0
        %2114 = vmatprep.subr.bf16.mxu0 0
        %2115 = vmatpush1.bf16.xpose.msra.mxu0 0
        %2116 = vmatprep.subr.bf16.mxu0 0
        %2117 = vmatpush1.bf16.xpose.msra.mxu0 0
        %2118 = vmatprep.subr.bf16.mxu0 0
        %2119 = vmatpush1.bf16.xpose.msra.mxu0 0
        %2120 = vmatprep.subr.bf16.mxu0 0
        %2121 = vmatpush1.bf16.xpose.msra.mxu0 0
        %2122 = vmatprep.subr.bf16.mxu0 0
        %2123 = vmatpush1.bf16.xpose.msra.mxu0 0
        %2124 = vmatprep.subr.bf16.mxu0 0
        %2125 = vmatpush1.bf16.xpose.msra.mxu0 0
        %2126 = vmatprep.subr.bf16.mxu0 0
        %2127 = vmatpush1.bf16.xpose.msra.mxu0 0
        %2128 = vmatprep.subr.bf16.mxu0 0
        %2129 = vmatpush1.bf16.xpose.msra.mxu0 0
        %2130 = vmatprep.subr.bf16.mxu0 0
        %2131 = vmatpush1.bf16.xpose.msra.mxu0 0
        %2132 = vmatprep.subr.bf16.mxu0 0
        %2133 = vmatpush1.bf16.xpose.msra.mxu0 0
        %2134 = vmatprep.subr.bf16.mxu0 0
        %2135 = vmatpush1.bf16.xpose.msra.mxu0 0
        %2136 = vmatprep.mubr.bf16.mxu0 0
        %2137 = vmatmul.mubr.bf16.gmra.mrb[0].mxu0 %v2099
        %v2138 = vpop.f32.mrb[0].mxu0
        %v2139 = vadd.f32 0.0, %v2138
        %v2140 = vpop.f32.mrb[0].mxu0
        %v2141 = vpop.f32.mrb[0].mxu0
        %v2142 = vpop.f32.mrb[0].mxu0
        %2143 = vdwg.mxu0
        %v2144 = vmul.f32 %v2093, 0.17677669
        %v2145 = vmul.f32 %v2139, 0.17677669
        %v2146 = vsel %vm751, %v2144, -inf
        %2147 = vmax.xlane.f32.xlu0 %v2146
        %v2148 = vpop.xlane.xlu0 %2147
        %v2149 = vsel %vm751, %v2145, -inf
        %2150 = vmax.xlane.f32.xlu0 %v2149
        %v2151 = vpop.xlane.xlu0 %2150
        %v2152 = vsub.f32 %v2144, %v2148
        %v2153 = vsub.f32 %v2145, %v2151
        %v2154 = vmul.f32 %v2152, 1.442695
        %v2155 = vpow.pop %v2154
        %v2156 = vmul.f32 %v2153, 1.442695
        %v2157 = vpow.pop %v2156
        %v2158 = vsel %vm751, %v2155, 0.0
        %2159 = vadd.xlane.f32.xlu0 %v2158
        %v2160 = vpop.xlane.xlu0 %2159
        %v2161 = vsel %vm751, %v2157, 0.0
        %2162 = vadd.xlane.f32.xlu0 %v2161
        %v2163 = vpop.xlane.xlu0 %2162
        %v2164 = vrcp.pop %v2160
        %v2165 = vrcp.pop %v2163
        %v2166 = vmul.f32 %v2155, %v2164
        %v2167 = vmul.f32 %v2157, %v2165
        %v2168 = vpack.c.bf16 %v2166, %v2166
        %v2169 = vpack.c.bf16 %v2167, %v2167
        %v2171 = vsel %vm751, %v2168, 0
        %v2174 = vsel %vm779, %v2050, 0
        %2176 = vmatprep.subr.bf16.mxu0 0
        %2177 = vmatpush1.bf16.msra.mxu0 %v2174
        %2178 = vmatprep.subr.bf16.mxu0 0
        %2179 = vmatpush1.bf16.msra.mxu0 0
        %2180 = vmatprep.subr.bf16.mxu0 0
        %2181 = vmatpush1.bf16.msra.mxu0 0
        %2182 = vmatprep.subr.bf16.mxu0 0
        %2183 = vmatpush1.bf16.msra.mxu0 0
        %2184 = vmatprep.subr.bf16.mxu0 0
        %2185 = vmatpush1.bf16.msra.mxu0 0
        %2186 = vmatprep.subr.bf16.mxu0 0
        %2187 = vmatpush1.bf16.msra.mxu0 0
        %2188 = vmatprep.subr.bf16.mxu0 0
        %2189 = vmatpush1.bf16.msra.mxu0 0
        %2190 = vmatprep.subr.bf16.mxu0 0
        %2191 = vmatpush1.bf16.msra.mxu0 0
        %2192 = vmatprep.subr.bf16.mxu0 0
        %2193 = vmatpush1.bf16.msra.mxu0 0
        %2194 = vmatprep.subr.bf16.mxu0 0
        %2195 = vmatpush1.bf16.msra.mxu0 0
        %2196 = vmatprep.subr.bf16.mxu0 0
        %2197 = vmatpush1.bf16.msra.mxu0 0
        %2198 = vmatprep.subr.bf16.mxu0 0
        %2199 = vmatpush1.bf16.msra.mxu0 0
        %2200 = vmatprep.subr.bf16.mxu0 0
        %2201 = vmatpush1.bf16.msra.mxu0 0
        %2202 = vmatprep.subr.bf16.mxu0 0
        %2203 = vmatpush1.bf16.msra.mxu0 0
        %2204 = vmatprep.subr.bf16.mxu0 0
        %2205 = vmatpush1.bf16.msra.mxu0 0
        %2206 = vmatprep.subr.bf16.mxu0 0
        %2207 = vmatpush1.bf16.msra.mxu0 0
        %2208 = vmatprep.mubr.bf16.mxu0 0
        %2209 = vmatmul.mubr.bf16.gmra.mrb[0].mxu0 %v2171
        %v2210 = vpop.f32.mrb[0].mxu0
        %v2211 = vadd.f32 0.0, %v2210
        %v2212 = vpop.f32.mrb[0].mxu0
        %v2213 = vpop.f32.mrb[0].mxu0
        %v2214 = vpop.f32.mrb[0].mxu0
        %2215 = vdwg.mxu0
        %v2217 = vsel %vm751, %v2169, 0
        %v2220 = vsel %vm779, %v2051, 0
        %2222 = vmatprep.subr.bf16.mxu0 0
        %2223 = vmatpush1.bf16.msra.mxu0 %v2220
        %2224 = vmatprep.subr.bf16.mxu0 0
        %2225 = vmatpush1.bf16.msra.mxu0 0
        %2226 = vmatprep.subr.bf16.mxu0 0
        %2227 = vmatpush1.bf16.msra.mxu0 0
        %2228 = vmatprep.subr.bf16.mxu0 0
        %2229 = vmatpush1.bf16.msra.mxu0 0
        %2230 = vmatprep.subr.bf16.mxu0 0
        %2231 = vmatpush1.bf16.msra.mxu0 0
        %2232 = vmatprep.subr.bf16.mxu0 0
        %2233 = vmatpush1.bf16.msra.mxu0 0
        %2234 = vmatprep.subr.bf16.mxu0 0
        %2235 = vmatpush1.bf16.msra.mxu0 0
        %2236 = vmatprep.subr.bf16.mxu0 0
        %2237 = vmatpush1.bf16.msra.mxu0 0
        %2238 = vmatprep.subr.bf16.mxu0 0
        %2239 = vmatpush1.bf16.msra.mxu0 0
        %2240 = vmatprep.subr.bf16.mxu0 0
        %2241 = vmatpush1.bf16.msra.mxu0 0
        %2242 = vmatprep.subr.bf16.mxu0 0
        %2243 = vmatpush1.bf16.msra.mxu0 0
        %2244 = vmatprep.subr.bf16.mxu0 0
        %2245 = vmatpush1.bf16.msra.mxu0 0
        %2246 = vmatprep.subr.bf16.mxu0 0
        %2247 = vmatpush1.bf16.msra.mxu0 0
        %2248 = vmatprep.subr.bf16.mxu0 0
        %2249 = vmatpush1.bf16.msra.mxu0 0
        %2250 = vmatprep.subr.bf16.mxu0 0
        %2251 = vmatpush1.bf16.msra.mxu0 0
        %2252 = vmatprep.subr.bf16.mxu0 0
        %2253 = vmatpush1.bf16.msra.mxu0 0
        %2254 = vmatprep.mubr.bf16.mxu0 0
        %2255 = vmatmul.mubr.bf16.gmra.mrb[0].mxu0 %v2217
        %v2256 = vpop.f32.mrb[0].mxu0
        %v2257 = vadd.f32 0.0, %v2256
        %v2258 = vpop.f32.mrb[0].mxu0
        %v2259 = vpop.f32.mrb[0].mxu0
        %v2260 = vpop.f32.mrb[0].mxu0
        %2261 = vdwg.mxu0
        %v2262 = vpack.c.bf16 %v2257, %v2211
        %s2263 = scalar_lea.vmem [#allocation13], 48
        %v2264 = vld [vmem:[%s2263] sm:$0xf]
        %v2265 = vld [vmem:[%s2263 + $0x4] sm:$0xf]
        %v2266 = vld [vmem:[%s2263 + $0x8] sm:$0xf]
        %v2267 = vld [vmem:[%s2263 + $0xc] sm:$0xf]
        %v2272 = vunpack.c.l.b16 %v2264
        %v2273 = vunpack.c.l.b16 %v2265
        %v2274 = vunpack.c.l.b16 %v2266
        %v2275 = vunpack.c.l.b16 %v2267
        %v2276 = vpack.c.b16 %v2273, %v2272
        %v2277 = vpack.c.b16 %v2275, %v2274
        %v2281 = vsel %vm464, %v2262, 0
        %2283 = vmatprep.subr.bf16.mxu0 0
        %2284 = vmatpush1.bf16.msra.mxu0 %v2276
        %2285 = vmatprep.subr.bf16.mxu0 0
        %2286 = vmatpush1.bf16.msra.mxu0 %v2277
        %2287 = vmatprep.subr.bf16.mxu0 0
        %2288 = vmatpush1.bf16.msra.mxu0 0
        %2289 = vmatprep.subr.bf16.mxu0 0
        %2290 = vmatpush1.bf16.msra.mxu0 0
        %2291 = vmatprep.subr.bf16.mxu0 0
        %2292 = vmatpush1.bf16.msra.mxu0 0
        %2293 = vmatprep.subr.bf16.mxu0 0
        %2294 = vmatpush1.bf16.msra.mxu0 0
        %2295 = vmatprep.subr.bf16.mxu0 0
        %2296 = vmatpush1.bf16.msra.mxu0 0
        %2297 = vmatprep.subr.bf16.mxu0 0
        %2298 = vmatpush1.bf16.msra.mxu0 0
        %2299 = vmatprep.subr.bf16.mxu0 0
        %2300 = vmatpush1.bf16.msra.mxu0 0
        %2301 = vmatprep.subr.bf16.mxu0 0
        %2302 = vmatpush1.bf16.msra.mxu0 0
        %2303 = vmatprep.subr.bf16.mxu0 0
        %2304 = vmatpush1.bf16.msra.mxu0 0
        %2305 = vmatprep.subr.bf16.mxu0 0
        %2306 = vmatpush1.bf16.msra.mxu0 0
        %2307 = vmatprep.subr.bf16.mxu0 0
        %2308 = vmatpush1.bf16.msra.mxu0 0
        %2309 = vmatprep.subr.bf16.mxu0 0
        %2310 = vmatpush1.bf16.msra.mxu0 0
        %2311 = vmatprep.subr.bf16.mxu0 0
        %2312 = vmatpush1.bf16.msra.mxu0 0
        %2313 = vmatprep.subr.bf16.mxu0 0
        %2314 = vmatpush1.bf16.msra.mxu0 0
        %2315 = vmatprep.mubr.bf16.mxu0 0
        %2316 = vmatmul.mubr.bf16.gmra.mrb[0].mxu0 %v2281
        %v2317 = vpop.f32.mrb[0].mxu0
        %v2318 = vadd.f32 0.0, %v2317
        %v2319 = vpop.f32.mrb[0].mxu0
        %v2320 = vpop.f32.mrb[0].mxu0
        %v2321 = vadd.f32 0.0, %v2320
        %v2322 = vpop.f32.mrb[0].mxu0
        %2323 = vdwg.mxu0
        %v2324 = vadd.f32 %v1858, %v2318
        %v2325 = vadd.f32 %v1859, %v2321
        %2326 = vst.msk [vmem:[%s431] sm:$0xff] %vm464, %v2324
        %2327 = vst.msk [vmem:[%s431 + $0x8] sm:$0xff] %vm464, %v2325
        %s2328 = sand.u32 %s199, 1
        %s2329 = scalar_lea.sflag [#allocation4], %s2328
        %s2330 = sand.u32 %s199, 1
        %s2331 = smul.addr %s2330, 16
        %s2332 = scalar_lea.vmem [#allocation14], %s2331
        // Predicated region
        $region77: #{tpu_custom_call.1} parent=47 // pred_check
          %p2333 = pneg %p209
        $region78: #{tpu_custom_call.1} parent=47 // pred_check_branch
          %2335 = sbr.rel (%p2333) target = $region80
        $region79: #{tpu_custom_call.1} parent=47 // pred_region
          %s2336 = smul.u32 2, %s29
          %s2338 = ssub.s32 256, 256
          %2339 = vsyncadd %s2329, %s2338
          %s2340 = smul.addr %s2336, 128
          %s2341 = scalar_lea.hbm %s7, %s2340
          %s2342 = sshll.u32 %s2332, 4
          %s2343 = int_to_ptr.vmem [resolvable:$true] %s2342
          %2348 = dma.vmem_to_hbm [thread:$0]  %s2343, 256, %s2341, %s2329, 128, 128, 8
        $region80: #{tpu_custom_call.1} parent=47 // pred_fallthru
          _
      $region48: #{tpu_custom_call.1} parent=5 // pred_fallthru
        _
      %p2349 = scmp.le.s32.totalorder 2, %s24
      // Predicated region
      $region81: #{tpu_custom_call.1} parent=5 // pred_check
        %p2350 = pneg %p2349
      $region82: #{tpu_custom_call.1} parent=5 // pred_check_branch
        %2352 = sbr.rel (%p2350) target = $region84
      $region83: #{tpu_custom_call.1} parent=5 // pred_region
        %s2353 = ssub.s32 %s24, 2
        // Predicated region
        $region85: #{tpu_custom_call.1} parent=83 // pred_check
          %p2354 = pneg %p215
        $region86: #{tpu_custom_call.1} parent=83 // pred_check_branch
          %2356 = sbr.rel (%p2354) target = $region88
        $region87: #{tpu_custom_call.1} parent=83 // pred_region
          %s2357 = sand.u32 %s200, 1
          %s2358 = scalar_lea.sflag [#allocation4], %s2357
          %s2359 = sand.u32 %s200, 1
          %s2360 = smul.addr %s2359, 16
          %s2361 = scalar_lea.vmem [#allocation14], %s2360
          %2362 = dma.done %s2358, 256
        $region88: #{tpu_custom_call.1} parent=83 // pred_fallthru
          _
      $region84: #{tpu_custom_call.1} parent=5 // pred_fallthru
        _
    $region6: #{tpu_custom_call.1} parent=1 // loop_footer
      %s28 = sadd.s32 1, %s24
    $region7: #{tpu_custom_call.1} parent=1 // loop_footer_branch
      %23 = sbr.rel target = $region3
    $region8: #{tpu_custom_call.1} parent=1 // loop_exit
      _
    %2363 = vsyncpa [#allocation3], 1
    %s2364 = scalar_lea.sflag [#allocation3], 1
    %2365 = vsyncpa %s2364, 1
    %2366 = vsyncpa [#allocation6], 1
    %s2367 = scalar_lea.sflag [#allocation6], 1
    %2368 = vsyncpa %s2367, 1
    %2369 = vsyncpa [#allocation9], 1
    %2370 = vsyncpa [#allocation12], 1
    %2371 = vsyncpa [#allocation4], 1
    %s2372 = scalar_lea.sflag [#allocation4], 1
    %2373 = vsyncpa %s2372, 1

</llo_original>
